<compile_context>
chip_gen: v5e
topology: v5e:2x2
jax: 0.10.0
libtpu: 0.0.40
codegen_flags: <defaults>
</compile_context>

<pallas_src>
import jax
import jax.numpy as jnp
from jax.experimental import pallas as pl
from jax.experimental.pallas import tpu as pltpu

IN_F = 768      # Linear1 in_features
HID_F = 394     # Linear1 out_features / Linear2 in_features
OUT_F = 19      # Linear2 out_features

# Lane-aligned padded sizes (last dim maps to the 128-lane vreg axis).
HID_P = 512     # 394 -> next multiple of 128
OUT_P = 128     # 19  -> 128 (for the second MXU matmul only)

MAX_TILE_B = 1024  # batch rows per grid step (multiple of 8)


def _round_up(x, m):
    return (x + m - 1) // m * m


def _ceil_div(a, b):
    return -(-a // b)


def mlp_kernel(x_ref, w1_ref, b1_ref, w2_ref, b2_ref, o_ref):
    # x:  (TB, 768) f32        w1: (768, HID_P) bf16   b1: (1, HID_P) f32
    # w2: (HID_P, OUT_P) bf16  b2: (1, OUT_P)  f32     o:  (TB, OUT_F) f32
    x = x_ref[...].astype(jnp.bfloat16)                 # in-kernel cast (free)
    h = jnp.dot(x, w1_ref[...], preferred_element_type=jnp.float32)
    h = jnp.maximum(h + b1_ref[...], 0.0)               # bias + ReLU in f32
    y = jnp.dot(h.astype(jnp.bfloat16), w2_ref[...],
                preferred_element_type=jnp.float32)
    y = y + b2_ref[...]
    # Store only the real 19 logits (masked partial store; cheap vs. HBM pass).
    o_ref[...] = y[:, :OUT_F].astype(o_ref.dtype)


def prepare_params(w1, b1, w2, b2):
    """One-time weight prep. PyTorch nn.Linear layout: w1 (394,768), w2 (19,394).
    Returns pre-transposed, lane-padded, bf16 weights and f32 biases."""
    w1_t = jnp.zeros((IN_F, HID_P), jnp.bfloat16).at[:, :HID_F].set(
        w1.T.astype(jnp.bfloat16))
    b1_p = jnp.zeros((1, HID_P), jnp.float32).at[0, :HID_F].set(
        b1.astype(jnp.float32))
    w2_t = jnp.zeros((HID_P, OUT_P), jnp.bfloat16).at[:HID_F, :OUT_F].set(
        w2.T.astype(jnp.bfloat16))
    b2_p = jnp.zeros((1, OUT_P), jnp.float32).at[0, :OUT_F].set(
        b2.astype(jnp.float32))
    return w1_t, b1_p, w2_t, b2_p


def _choose_tile_b(B):
    """Batch tile: multiple of 8, <= MAX_TILE_B, and >= 2 (even) grid steps
    whenever B > 8 so both v7x TensorCores get work."""
    if B <= 8:
        return 8
    n_tiles = max(2, _ceil_div(B, MAX_TILE_B))
    if n_tiles % 2:
        n_tiles += 1
    return _round_up(_ceil_div(B, n_tiles), 8)


def clasificador_forward(x, params):
    """x: (B, 768) float. params: output of prepare_params. Returns logits (B, 19)."""
    w1_t, b1_p, w2_t, b2_p = params
    B = x.shape[0]
    TB = _choose_tile_b(B)
    grid = (pl.cdiv(B, TB),)

    cost = pl.CostEstimate(
        flops=2 * B * (IN_F * HID_P + HID_P * OUT_P),   # padded (actual MXU) work
        transcendentals=0,
        bytes_accessed=(B * IN_F * 4                     # x read (f32, once)
                        + w1_t.size * 2 + w2_t.size * 2  # bf16 weights
                        + b1_p.size * 4 + b2_p.size * 4  # f32 biases
                        + B * OUT_F * 4),                # f32 logits write
    )

    return pl.pallas_call(
        mlp_kernel,
        out_shape=jax.ShapeDtypeStruct((B, OUT_F), jnp.float32),
        grid=grid,
        in_specs=[
            pl.BlockSpec((TB, IN_F), lambda i: (i, 0)),      # x: tiled over batch
            pl.BlockSpec((IN_F, HID_P), lambda i: (0, 0)),   # w1: VMEM-resident
            pl.BlockSpec((1, HID_P), lambda i: (0, 0)),      # b1: resident
            pl.BlockSpec((HID_P, OUT_P), lambda i: (0, 0)),  # w2: resident
            pl.BlockSpec((1, OUT_P), lambda i: (0, 0)),      # b2: resident
        ],
        out_specs=pl.BlockSpec((TB, OUT_F), lambda i: (i, 0)),
        compiler_params=pltpu.CompilerParams(
            dimension_semantics=("parallel",),               # megacore on v7x
            vmem_limit_bytes=48 * 1024 * 1024,               # TB=1024 working set
        ),
        cost_estimate=cost,
    )(x, w1_t, b1_p, w2_t, b2_p)


def _reference(x, w1, b1, w2, b2):
    h = jnp.maximum(x @ w1.T + b1, 0.0)
    return h @ w2.T + b2


if __name__ == "__main__":
    key = jax.random.PRNGKey(0)
    k_x, k_w1, k_b1, k_w2, k_b2 = jax.random.split(key, 5)

    B = 16  # small batch; exercises 2 grid steps (TB = 8)
    x = jax.random.normal(k_x, (B, IN_F), jnp.float32)

    # Deterministic synthetic parameters (shapes match nn.Linear(768,394)/(394,19)).
    w1 = jax.random.normal(k_w1, (HID_F, IN_F), jnp.float32) * 0.02
    b1 = jax.random.normal(k_b1, (HID_F,), jnp.float32) * 0.02
    w2 = jax.random.normal(k_w2, (OUT_F, HID_F), jnp.float32) * 0.02
    b2 = jax.random.normal(k_b2, (OUT_F,), jnp.float32) * 0.02

    params = prepare_params(w1, b1, w2, b2)   # hoisted, done once

    y = clasificador_forward(x, params)
    y = jax.block_until_ready(y)

    y_ref = _reference(x, w1, b1, w2, b2)
    assert y.shape == (B, OUT_F), y.shape
    # bf16 matmul inputs + f32 accumulation vs full-f32 reference -> loose tol.
    assert jnp.allclose(y, y_ref, atol=2e-2, rtol=2e-2), "mismatch vs reference"

    print("KERNEL_OK")
</pallas_src>

<mosaic_0001>
module attributes {stable_mosaic.version = 11 : i64} {
  func.func @mlp_kernel(%arg0: i32, %arg1: memref<8x768xf32, #tpu.memory_space<vmem>>, %arg2: memref<768x512xbf16, #tpu.memory_space<vmem>>, %arg3: memref<1x512xf32, #tpu.memory_space<vmem>>, %arg4: memref<512x128xbf16, #tpu.memory_space<vmem>>, %arg5: memref<1x128xf32, #tpu.memory_space<vmem>>, %arg6: memref<8x19xf32, #tpu.memory_space<vmem>>) attributes {dimension_semantics = [#tpu.dimension_semantics<parallel>], iteration_bounds = array<i64: 2>, scalar_prefetch = 0 : i64, scratch_operands = 0 : i64, tpu.core_type = #tpu.core_type<tc>, window_params = [{transform_indices = @transform_0, window_bounds = array<i64: 8, 768>}, {pipeline_mode = #tpu.pipeline_mode<synchronous>, transform_indices = @transform_1, window_bounds = array<i64: 768, 512>}, {pipeline_mode = #tpu.pipeline_mode<synchronous>, transform_indices = @transform_2, window_bounds = array<i64: 1, 512>}, {pipeline_mode = #tpu.pipeline_mode<synchronous>, transform_indices = @transform_3, window_bounds = array<i64: 512, 128>}, {pipeline_mode = #tpu.pipeline_mode<synchronous>, transform_indices = @transform_4, window_bounds = array<i64: 1, 128>}, {transform_indices = @transform_5, window_bounds = array<i64: 8, 19>}]} {
    %c0 = arith.constant 0 : index
    %c0_0 = arith.constant 0 : index
    %0 = vector.load %arg1[%c0, %c0_0] : memref<8x768xf32, #tpu.memory_space<vmem>>, vector<8x768xf32>
    %1 = arith.truncf %0 : vector<8x768xf32> to vector<8x768xbf16>
    %c0_1 = arith.constant 0 : index
    %c0_2 = arith.constant 0 : index
    %2 = vector.load %arg2[%c0_1, %c0_2] : memref<768x512xbf16, #tpu.memory_space<vmem>>, vector<768x512xbf16>
    %cst = arith.constant dense<0.000000e+00> : vector<8x512xf32>
    %3 = tpu.matmul %1, %2, %cst {dimension_numbers = #tpu.dot_dimension_numbers<[1], [0], [0], [1], [0, 0, 1, 1], [], []>} : vector<8x768xbf16>, vector<768x512xbf16>, vector<8x512xf32> -> vector<8x512xf32>
    %c0_3 = arith.constant 0 : index
    %c0_4 = arith.constant 0 : index
    %4 = vector.load %arg3[%c0_3, %c0_4] : memref<1x512xf32, #tpu.memory_space<vmem>>, vector<1x512xf32>
    %5 = vector.broadcast %4 : vector<1x512xf32> to vector<8x512xf32>
    %6 = arith.addf %3, %5 : vector<8x512xf32>
    %cst_5 = arith.constant 0.000000e+00 : f32
    %7 = vector.broadcast %cst_5 : f32 to vector<8x512xf32>
    %8 = arith.maximumf %6, %7 : vector<8x512xf32>
    %9 = arith.truncf %8 : vector<8x512xf32> to vector<8x512xbf16>
    %c0_6 = arith.constant 0 : index
    %c0_7 = arith.constant 0 : index
    %10 = vector.load %arg4[%c0_6, %c0_7] : memref<512x128xbf16, #tpu.memory_space<vmem>>, vector<512x128xbf16>
    %cst_8 = arith.constant dense<0.000000e+00> : vector<8x128xf32>
    %11 = tpu.matmul %9, %10, %cst_8 {dimension_numbers = #tpu.dot_dimension_numbers<[1], [0], [0], [1], [0, 0, 1, 1], [], []>} : vector<8x512xbf16>, vector<512x128xbf16>, vector<8x128xf32> -> vector<8x128xf32>
    %c0_9 = arith.constant 0 : index
    %c0_10 = arith.constant 0 : index
    %12 = vector.load %arg5[%c0_9, %c0_10] : memref<1x128xf32, #tpu.memory_space<vmem>>, vector<1x128xf32>
    %13 = vector.broadcast %12 : vector<1x128xf32> to vector<8x128xf32>
    %14 = arith.addf %11, %13 : vector<8x128xf32>
    %15 = vector.extract_strided_slice %14 {offsets = [0, 0], sizes = [8, 19], strides = [1, 1]} : vector<8x128xf32> to vector<8x19xf32>
    %c0_11 = arith.constant 0 : index
    %c0_12 = arith.constant 0 : index
    %16 = vector.load %arg6[%c0_11, %c0_12] : memref<8x19xf32, #tpu.memory_space<vmem>>, vector<8x19xf32>
    tpu.vector_store %arg6[%c0_11, %c0_12], %15 {strides = array<i32>} : memref<8x19xf32, #tpu.memory_space<vmem>>, vector<8x19xf32>,
    return
  }
  func.func @transform_0(%arg0: i32) -> (i32, i32) {
    %c0_i32 = arith.constant 0 : i32
    %c0_i32_0 = arith.constant 0 : i32
    return %arg0, %c0_i32 : i32, i32
  }
  func.func @transform_1(%arg0: i32) -> (i32, i32) {
    %c0_i32 = arith.constant 0 : i32
    %c0_i32_0 = arith.constant 0 : i32
    %c0_i32_1 = arith.constant 0 : i32
    return %c0_i32, %c0_i32_0 : i32, i32
  }
  func.func @transform_2(%arg0: i32) -> (i32, i32) {
    %c0_i32 = arith.constant 0 : i32
    %c0_i32_0 = arith.constant 0 : i32
    %c0_i32_1 = arith.constant 0 : i32
    return %c0_i32, %c0_i32_0 : i32, i32
  }
  func.func @transform_3(%arg0: i32) -> (i32, i32) {
    %c0_i32 = arith.constant 0 : i32
    %c0_i32_0 = arith.constant 0 : i32
    %c0_i32_1 = arith.constant 0 : i32
    return %c0_i32, %c0_i32_0 : i32, i32
  }
  func.func @transform_4(%arg0: i32) -> (i32, i32) {
    %c0_i32 = arith.constant 0 : i32
    %c0_i32_0 = arith.constant 0 : i32
    %c0_i32_1 = arith.constant 0 : i32
    return %c0_i32, %c0_i32_0 : i32, i32
  }
  func.func @transform_5(%arg0: i32) -> (i32, i32) {
    %c0_i32 = arith.constant 0 : i32
    %c0_i32_0 = arith.constant 0 : i32
    return %arg0, %c0_i32 : i32, i32
  }
}

</mosaic_0001>

<llo_original>
// kernel: tpu_custom_call.1
$region0: #{tpu_custom_call.1}
  #allocation0 [shape = 'u32[]', space=smem, size = 0x4, offset = 0x4, fixed_abs, tag = 'smem constant byte address 0x4 - core index']
  #allocation1 [shape = 'u32[72,128]{1,0:T(1,128)}', space=vmem, size = 0x9000, scoped, tag = 'internal scratch']
  %s0 = inlined_call_operand.hbm [shape: f32[16,768], index: 0, kind: input, shape index: {}]
  %s1 = inlined_call_operand.hbm [shape: bf16[768,512], index: 1, kind: input, shape index: {}]
  %s2 = inlined_call_operand.hbm [shape: f32[1,512], index: 2, kind: input, shape index: {}]
  %s3 = inlined_call_operand.hbm [shape: bf16[512,128], index: 3, kind: input, shape index: {}]
  %s4 = inlined_call_operand.vmem [shape: f32[1,128], index: 4, kind: input, shape index: {}]
  %s5 = inlined_call_operand.hbm [shape: f32[16,19], index: 5, kind: output, shape index: {}]
  %s6 = sld [smem:[#allocation0]]
  $region69: #{tpu_custom_call.1} parent=0
    _
  %s8 = ssub.s32 1, %s6
  %s9 = scalar_select 0, %s8, %s6
  $region1: #{tpu_custom_call.1} parent=0
    #allocation2 [shape = 'u8[49152]{0}', space=vmem, size = 0xc000, scoped, tag = 'input window, operand 0']
    #allocation3 [shape = 's32[2]{0}', space=sflag, size = 0x8, scoped, tag = 'scoped memory for tpu_custom_call.1']
    #allocation4 [shape = 's32[2]{0}', space=sflag, size = 0x8, scoped, tag = 'scoped memory for tpu_custom_call.1']
    #allocation5 [shape = 'u8[786432]{0}', space=vmem, size = 0xc0000, scoped, tag = 'input window, operand 1, single buffered']
    #allocation6 [shape = 's32[1]{0}', space=sflag, size = 0x4, scoped, tag = 'scoped memory for tpu_custom_call.1']
    #allocation7 [shape = 'u8[2048]{0}', space=vmem, size = 0x800, scoped, tag = 'input window, operand 2, single buffered']
    #allocation8 [shape = 'u8[131072]{0}', space=vmem, size = 0x20000, scoped, tag = 'input window, operand 3, single buffered']
    #allocation9 [shape = 's32[1]{0}', space=sflag, size = 0x4, scoped, tag = 'scoped memory for tpu_custom_call.1']
    #allocation10 [shape = 'u8[8192]{0}', space=vmem, size = 0x2000, scoped, tag = 'output window, operand 0']
    %10 = vsyncpa [#allocation3], 0
    %s11 = scalar_lea.sflag [#allocation3], 1
    %12 = vsyncpa %s11, 0
    %13 = vsyncpa [#allocation6], 0
    %14 = vsyncpa [#allocation9], 0
    %15 = vsyncpa [#allocation4], 0
    %s16 = scalar_lea.sflag [#allocation4], 1
    %17 = vsyncpa %s16, 0
    loop: start=0, step=1, limit=4
    $region2: #{tpu_custom_call.1} parent=1 // loop_pre_header
      _
    $region3: #{tpu_custom_call.1} parent=1 // loop_header
      %s19 = sphi 0, %s23
      %p20 = scmp.ge.s32.totalorder %s19, 4
      %s29 = sphi 0, %s31
      %s32 = sphi 0, %s29
      %s33 = sphi 0, %s32
      %s49 = sphi 0, %s33
      %s53 = sphi 0, %s53
      %s55 = sphi 0, %s53
      %s56 = sphi 0, %s55
      %s70 = sphi 0, %s56
      %s74 = sphi 0, %s74
      %s76 = sphi 0, %s74
      %s77 = sphi 0, %s76
      %s91 = sphi 0, %s77
      %s95 = sphi 0, %s95
      %s97 = sphi 0, %s95
      %s98 = sphi 0, %s97
      %s112 = sphi 0, %s98
      %s116 = sphi 0, %s116
      %s118 = sphi 0, %s116
      %s119 = sphi 0, %s118
      %s133 = sphi 0, %s119
      %s139 = sphi 0, %s141
      %s142 = sphi 0, %s139
      %s143 = sphi 0, %s142
      %s159 = sphi 0, %s143
    $region4: #{tpu_custom_call.1} parent=1 // loop_header_branch
      %22 = sbr.rel (%p20) target = $region8
    $region5: #{tpu_custom_call.1} parent=1 // loop_body
      %s24 = ssub.s32 %s19, 1
      %s25 = ssub.s32 %s19, 2
      %s26 = sadd.s32 %s19, 1
      %s27 = ssub.s32 %s19, %s26
      %p28 = scmp.eq.s32.totalorder %s27, 0
      %s30 = sadd.s32 %s29, 1
      %s31 = scalar_select %p28, %s29, %s30
      %p34 = pneg %p28
      %p35 = scmp.eq.s32.totalorder %s19, 1
      %p36 = por %p34, %p35
      %p37 = scmp.ne.s32.totalorder %s29, %s32
      %p38 = scmp.eq.s32.totalorder %s19, 0
      %p39 = por %p37, %p38
      %p40 = scmp.ne.s32.totalorder %s29, %s32
      %p41 = scmp.eq.s32.totalorder %s24, 1
      %p42 = por %p40, %p41
      %p43 = scmp.ne.s32.totalorder %s32, %s33
      %p44 = scmp.eq.s32.totalorder %s24, 0
      %p45 = por %p43, %p44
      %p46 = scmp.ne.s32.totalorder %s32, %s33
      %p47 = scmp.eq.s32.totalorder %s25, 1
      %p48 = por %p46, %p47
      %p50 = scmp.ne.s32.totalorder %s33, %s49
      %p51 = scmp.eq.s32.totalorder %s25, 0
      %p52 = por %p50, %p51
      %s54 = sadd.s32 %s53, 1
      %p57 = scmp.eq.s32.totalorder %s19, 1
      %p58 = scmp.ne.s32.totalorder %s53, %s55
      %p59 = scmp.eq.s32.totalorder %s19, 0
      %p60 = por %p58, %p59
      %p61 = scmp.ne.s32.totalorder %s53, %s55
      %p62 = scmp.eq.s32.totalorder %s24, 1
      %p63 = por %p61, %p62
      %p64 = scmp.ne.s32.totalorder %s55, %s56
      %p65 = scmp.eq.s32.totalorder %s24, 0
      %p66 = por %p64, %p65
      %p67 = scmp.ne.s32.totalorder %s55, %s56
      %p68 = scmp.eq.s32.totalorder %s25, 1
      %p69 = por %p67, %p68
      %p71 = scmp.ne.s32.totalorder %s56, %s70
      %p72 = scmp.eq.s32.totalorder %s25, 0
      %p73 = por %p71, %p72
      %s75 = sadd.s32 %s74, 1
      %p78 = scmp.eq.s32.totalorder %s19, 1
      %p79 = scmp.ne.s32.totalorder %s74, %s76
      %p80 = scmp.eq.s32.totalorder %s19, 0
      %p81 = por %p79, %p80
      %p82 = scmp.ne.s32.totalorder %s74, %s76
      %p83 = scmp.eq.s32.totalorder %s24, 1
      %p84 = por %p82, %p83
      %p85 = scmp.ne.s32.totalorder %s76, %s77
      %p86 = scmp.eq.s32.totalorder %s24, 0
      %p87 = por %p85, %p86
      %p88 = scmp.ne.s32.totalorder %s76, %s77
      %p89 = scmp.eq.s32.totalorder %s25, 1
      %p90 = por %p88, %p89
      %p92 = scmp.ne.s32.totalorder %s77, %s91
      %p93 = scmp.eq.s32.totalorder %s25, 0
      %p94 = por %p92, %p93
      %s96 = sadd.s32 %s95, 1
      %p99 = scmp.eq.s32.totalorder %s19, 1
      %p100 = scmp.ne.s32.totalorder %s95, %s97
      %p101 = scmp.eq.s32.totalorder %s19, 0
      %p102 = por %p100, %p101
      %p103 = scmp.ne.s32.totalorder %s95, %s97
      %p104 = scmp.eq.s32.totalorder %s24, 1
      %p105 = por %p103, %p104
      %p106 = scmp.ne.s32.totalorder %s97, %s98
      %p107 = scmp.eq.s32.totalorder %s24, 0
      %p108 = por %p106, %p107
      %p109 = scmp.ne.s32.totalorder %s97, %s98
      %p110 = scmp.eq.s32.totalorder %s25, 1
      %p111 = por %p109, %p110
      %p113 = scmp.ne.s32.totalorder %s98, %s112
      %p114 = scmp.eq.s32.totalorder %s25, 0
      %p115 = por %p113, %p114
      %s117 = sadd.s32 %s116, 1
      %p120 = scmp.eq.s32.totalorder %s19, 1
      %p121 = scmp.ne.s32.totalorder %s116, %s118
      %p122 = scmp.eq.s32.totalorder %s19, 0
      %p123 = por %p121, %p122
      %p124 = scmp.ne.s32.totalorder %s116, %s118
      %p125 = scmp.eq.s32.totalorder %s24, 1
      %p126 = por %p124, %p125
      %p127 = scmp.ne.s32.totalorder %s118, %s119
      %p128 = scmp.eq.s32.totalorder %s24, 0
      %p129 = por %p127, %p128
      %p130 = scmp.ne.s32.totalorder %s118, %s119
      %p131 = scmp.eq.s32.totalorder %s25, 1
      %p132 = por %p130, %p131
      %p134 = scmp.ne.s32.totalorder %s119, %s133
      %p135 = scmp.eq.s32.totalorder %s25, 0
      %p136 = por %p134, %p135
      %s137 = ssub.s32 %s19, %s26
      %p138 = scmp.eq.s32.totalorder %s137, 0
      %s140 = sadd.s32 %s139, 1
      %s141 = scalar_select %p138, %s139, %s140
      %p144 = pneg %p138
      %p145 = scmp.eq.s32.totalorder %s19, 1
      %p146 = por %p144, %p145
      %p147 = scmp.ne.s32.totalorder %s139, %s142
      %p148 = scmp.eq.s32.totalorder %s19, 0
      %p149 = por %p147, %p148
      %p150 = scmp.ne.s32.totalorder %s139, %s142
      %p151 = scmp.eq.s32.totalorder %s24, 1
      %p152 = por %p150, %p151
      %p153 = scmp.ne.s32.totalorder %s142, %s143
      %p154 = scmp.eq.s32.totalorder %s24, 0
      %p155 = por %p153, %p154
      %p156 = scmp.ne.s32.totalorder %s142, %s143
      %p157 = scmp.eq.s32.totalorder %s25, 1
      %p158 = por %p156, %p157
      %p160 = scmp.ne.s32.totalorder %s143, %s159
      %p161 = scmp.eq.s32.totalorder %s25, 0
      %p162 = por %p160, %p161
      %p163 = scmp.le.s32.totalorder 1, %s19
      %p164 = scmp.lt.s32.totalorder %s19, 3
      %p165 = pnand %p163, %p164
      %p166 = pneg %p165
      // Predicated region
      $region9: #{tpu_custom_call.1} parent=5 // pred_check
        _
      $region10: #{tpu_custom_call.1} parent=5 // pred_check_branch
        %168 = sbr.rel (%p165) target = $region12
      $region11: #{tpu_custom_call.1} parent=5 // pred_region
        %s169 = ssub.s32 %s19, 1
        // Predicated region
        $region13: #{tpu_custom_call.1} parent=11 // pred_check
          %p170 = pneg %p66
        $region14: #{tpu_custom_call.1} parent=11 // pred_check_branch
          %172 = sbr.rel (%p170) target = $region16
        $region15: #{tpu_custom_call.1} parent=11 // pred_region
          %174 = vsyncadd [#allocation6], 0
          %s175 = sshll.u32 %s1, 4
          %s176 = int_to_ptr.hbm [resolvable:$true] %s175
          %s177 = sshll.u32 [#allocation5], 4
          %s178 = int_to_ptr.vmem [resolvable:$true] %s177
          %183 = dma.hbm_to_vmem [thread:$0]  %s176, 24576, %s178, [#allocation6], 256, 256, 16
        $region16: #{tpu_custom_call.1} parent=11 // pred_fallthru
          _
        // Predicated region
        $region17: #{tpu_custom_call.1} parent=11 // pred_check
          %p184 = pneg %p87
        $region18: #{tpu_custom_call.1} parent=11 // pred_check_branch
          %186 = sbr.rel (%p184) target = $region20
        $region19: #{tpu_custom_call.1} parent=11 // pred_region
          %188 = vsyncadd [#allocation6], 0
          %s190 = sshll.u32 %s2, 4
          %s191 = int_to_ptr.hbm [resolvable:$true] %s190
          %s192 = sshll.u32 [#allocation7], 4
          %s193 = int_to_ptr.vmem [resolvable:$true] %s192
          %195 = dma.hbm_to_vmem [thread:$0]  %s191, 64, %s193, [#allocation6]
        $region20: #{tpu_custom_call.1} parent=11 // pred_fallthru
          _
        // Predicated region
        $region21: #{tpu_custom_call.1} parent=11 // pred_check
          %p196 = pneg %p108
        $region22: #{tpu_custom_call.1} parent=11 // pred_check_branch
          %198 = sbr.rel (%p196) target = $region24
        $region23: #{tpu_custom_call.1} parent=11 // pred_region
          %200 = vsyncadd [#allocation9], 0
          %s201 = sshll.u32 %s3, 4
          %s202 = int_to_ptr.hbm [resolvable:$true] %s201
          %s203 = sshll.u32 [#allocation8], 4
          %s204 = int_to_ptr.vmem [resolvable:$true] %s203
          %209 = dma.hbm_to_vmem [thread:$0]  %s202, 4096, %s204, [#allocation9], 64, 64, 4
        $region24: #{tpu_custom_call.1} parent=11 // pred_fallthru
          _
        // Predicated region
        $region25: #{tpu_custom_call.1} parent=11 // pred_check
          %p210 = pneg %p129
        $region26: #{tpu_custom_call.1} parent=11 // pred_check_branch
          %212 = sbr.rel (%p210) target = $region28
        $region27: #{tpu_custom_call.1} parent=11 // pred_region
          _
        $region28: #{tpu_custom_call.1} parent=11 // pred_fallthru
          _
      $region12: #{tpu_custom_call.1} parent=5 // pred_fallthru
        _
      %p213 = scmp.lt.s32.totalorder %s19, 2
      // Predicated region
      $region29: #{tpu_custom_call.1} parent=5 // pred_check
        %p214 = pneg %p213
      $region30: #{tpu_custom_call.1} parent=5 // pred_check_branch
        %216 = sbr.rel (%p214) target = $region32
      $region31: #{tpu_custom_call.1} parent=5 // pred_region
        // Predicated region
        $region33: #{tpu_custom_call.1} parent=31 // pred_check
          %p217 = pneg %p39
        $region34: #{tpu_custom_call.1} parent=31 // pred_check_branch
          %219 = sbr.rel (%p217) target = $region36
        $region35: #{tpu_custom_call.1} parent=31 // pred_region
          %s220 = sand.u32 %s29, 1
          %s221 = scalar_lea.sflag [#allocation3], %s220
          %s222 = sand.u32 %s29, 1
          %s223 = smul.addr %s222, 48
          %s224 = scalar_lea.vmem [#allocation2], %s223
          %226 = vsyncadd %s221, 0
          %s227 = smul.addr %s19, 6
          %s228 = smul.addr %s227, 8
          %s229 = scalar_lea.hbm %s0, %s228
          %s231 = sshll.u32 %s229, 4
          %s232 = int_to_ptr.hbm [resolvable:$true] %s231
          %s233 = sshll.u32 %s224, 4
          %s234 = int_to_ptr.vmem [resolvable:$true] %s233
          %236 = dma.hbm_to_vmem [thread:$0]  %s232, 768, %s234, %s221
        $region36: #{tpu_custom_call.1} parent=31 // pred_fallthru
          _
      $region32: #{tpu_custom_call.1} parent=5 // pred_fallthru
        _
      %p237 = scmp.le.s32.totalorder 1, %s19
      %p238 = scmp.lt.s32.totalorder %s19, 3
      %p239 = pnand %p237, %p238
      %p240 = pneg %p239
      // Predicated region
      $region37: #{tpu_custom_call.1} parent=5 // pred_check
        _
      $region38: #{tpu_custom_call.1} parent=5 // pred_check_branch
        %242 = sbr.rel (%p239) target = $region40
      $region39: #{tpu_custom_call.1} parent=5 // pred_region
        %s243 = ssub.s32 %s19, 1
        %s244 = sand.u32 %s32, 1
        %s245 = scalar_lea.sflag [#allocation3], %s244
        %s246 = sand.u32 %s32, 1
        %s247 = smul.addr %s246, 48
        %s248 = scalar_lea.vmem [#allocation2], %s247
        // Predicated region
        $region41: #{tpu_custom_call.1} parent=39 // pred_check
          %p249 = pneg %p45
        $region42: #{tpu_custom_call.1} parent=39 // pred_check_branch
          %251 = sbr.rel (%p249) target = $region44
        $region43: #{tpu_custom_call.1} parent=39 // pred_region
          %253 = dma.done %s245, 768
        $region44: #{tpu_custom_call.1} parent=39 // pred_fallthru
          _
        // Predicated region
        $region45: #{tpu_custom_call.1} parent=39 // pred_check
          %p254 = pneg %p66
        $region46: #{tpu_custom_call.1} parent=39 // pred_check_branch
          %256 = sbr.rel (%p254) target = $region48
        $region47: #{tpu_custom_call.1} parent=39 // pred_region
          %258 = dma.done [#allocation6], 24576
        $region48: #{tpu_custom_call.1} parent=39 // pred_fallthru
          _
        // Predicated region
        $region49: #{tpu_custom_call.1} parent=39 // pred_check
          %p259 = pneg %p87
        $region50: #{tpu_custom_call.1} parent=39 // pred_check_branch
          %261 = sbr.rel (%p259) target = $region52
        $region51: #{tpu_custom_call.1} parent=39 // pred_region
          %263 = dma.done [#allocation6], 64
        $region52: #{tpu_custom_call.1} parent=39 // pred_fallthru
          _
        // Predicated region
        $region53: #{tpu_custom_call.1} parent=39 // pred_check
          %p264 = pneg %p108
        $region54: #{tpu_custom_call.1} parent=39 // pred_check_branch
          %266 = sbr.rel (%p264) target = $region56
        $region55: #{tpu_custom_call.1} parent=39 // pred_region
          %268 = dma.done [#allocation9], 4096
        $region56: #{tpu_custom_call.1} parent=39 // pred_fallthru
          _
        %s269 = sand.u32 %s32, 1
        %s270 = scalar_lea.sflag [#allocation3], %s269
        %s271 = sand.u32 %s32, 1
        %s272 = smul.addr %s271, 48
        %s273 = scalar_lea.vmem [#allocation2], %s272
        %p274 = pneg %p45
        %p275 = pneg %p42
        %p276 = pneg %p66
        %p277 = pneg %p63
        %p278 = pneg %p87
        %p279 = pneg %p84
        %p280 = pneg %p108
        %p281 = pneg %p105
        %p282 = pneg %p129
        %p283 = pneg %p126
        %p284 = pneg %p155
        %p285 = pneg %p152
        %s286 = sand.u32 %s142, 1
        %s287 = scalar_lea.sflag [#allocation4], %s286
        %s288 = sand.u32 %s142, 1
        %s289 = smul.addr %s288, 8
        %s290 = scalar_lea.vmem [#allocation10], %s289
        %v291 = vld [vmem:[%s248] sm:$0xff]
        %v292 = vld [vmem:[%s248 + $0x8] sm:$0xff]
        %v293 = vld [vmem:[%s248 + $0x10] sm:$0xff]
        %v294 = vld [vmem:[%s248 + $0x18] sm:$0xff]
        %v295 = vld [vmem:[%s248 + $0x20] sm:$0xff]
        %v296 = vld [vmem:[%s248 + $0x28] sm:$0xff]
        %v297 = vpack.c.bf16 %v291, %v291
        %v298 = vpack.c.bf16 %v292, %v292
        %v299 = vpack.c.bf16 %v293, %v293
        %v300 = vpack.c.bf16 %v294, %v294
        %v301 = vpack.c.bf16 %v295, %v295
        %v302 = vpack.c.bf16 %v296, %v296
        %v303 = vld [vmem:[#allocation5] sm:$0xff]
        %v304 = vld [vmem:[#allocation5 + $0x8] sm:$0xff]
        %v305 = vld [vmem:[#allocation5 + $0x10] sm:$0xff]
        %v306 = vld [vmem:[#allocation5 + $0x18] sm:$0xff]
        %v307 = vld [vmem:[#allocation5 + $0x20] sm:$0xff]
        %v308 = vld [vmem:[#allocation5 + $0x28] sm:$0xff]
        %v309 = vld [vmem:[#allocation5 + $0x30] sm:$0xff]
        %v310 = vld [vmem:[#allocation5 + $0x38] sm:$0xff]
        %v311 = vld [vmem:[#allocation5 + $0x40] sm:$0xff]
        %v312 = vld [vmem:[#allocation5 + $0x48] sm:$0xff]
        %v313 = vld [vmem:[#allocation5 + $0x50] sm:$0xff]
        %v314 = vld [vmem:[#allocation5 + $0x58] sm:$0xff]
        %v315 = vld [vmem:[#allocation5 + $0x60] sm:$0xff]
        %v316 = vld [vmem:[#allocation5 + $0x68] sm:$0xff]
        %v317 = vld [vmem:[#allocation5 + $0x70] sm:$0xff]
        %v318 = vld [vmem:[#allocation5 + $0x78] sm:$0xff]
        %v319 = vld [vmem:[#allocation5 + $0x80] sm:$0xff]
        %v320 = vld [vmem:[#allocation5 + $0x88] sm:$0xff]
        %v321 = vld [vmem:[#allocation5 + $0x90] sm:$0xff]
        %v322 = vld [vmem:[#allocation5 + $0x98] sm:$0xff]
        %v323 = vld [vmem:[#allocation5 + $0xa0] sm:$0xff]
        %v324 = vld [vmem:[#allocation5 + $0xa8] sm:$0xff]
        %v325 = vld [vmem:[#allocation5 + $0xb0] sm:$0xff]
        %v326 = vld [vmem:[#allocation5 + $0xb8] sm:$0xff]
        %v327 = vld [vmem:[#allocation5 + $0xc0] sm:$0xff]
        %v328 = vld [vmem:[#allocation5 + $0xc8] sm:$0xff]
        %v329 = vld [vmem:[#allocation5 + $0xd0] sm:$0xff]
        %v330 = vld [vmem:[#allocation5 + $0xd8] sm:$0xff]
        %v331 = vld [vmem:[#allocation5 + $0xe0] sm:$0xff]
        %v332 = vld [vmem:[#allocation5 + $0xe8] sm:$0xff]
        %v333 = vld [vmem:[#allocation5 + $0xf0] sm:$0xff]
        %v334 = vld [vmem:[#allocation5 + $0xf8] sm:$0xff]
        %v335 = vld [vmem:[#allocation5 + $0x100] sm:$0xff]
        %v336 = vld [vmem:[#allocation5 + $0x108] sm:$0xff]
        %v337 = vld [vmem:[#allocation5 + $0x110] sm:$0xff]
        %v338 = vld [vmem:[#allocation5 + $0x118] sm:$0xff]
        %v339 = vld [vmem:[#allocation5 + $0x120] sm:$0xff]
        %v340 = vld [vmem:[#allocation5 + $0x128] sm:$0xff]
        %v341 = vld [vmem:[#allocation5 + $0x130] sm:$0xff]
        %v342 = vld [vmem:[#allocation5 + $0x138] sm:$0xff]
        %v343 = vld [vmem:[#allocation5 + $0x140] sm:$0xff]
        %v344 = vld [vmem:[#allocation5 + $0x148] sm:$0xff]
        %v345 = vld [vmem:[#allocation5 + $0x150] sm:$0xff]
        %v346 = vld [vmem:[#allocation5 + $0x158] sm:$0xff]
        %v347 = vld [vmem:[#allocation5 + $0x160] sm:$0xff]
        %v348 = vld [vmem:[#allocation5 + $0x168] sm:$0xff]
        %v349 = vld [vmem:[#allocation5 + $0x170] sm:$0xff]
        %v350 = vld [vmem:[#allocation5 + $0x178] sm:$0xff]
        %v351 = vld [vmem:[#allocation5 + $0x180] sm:$0xff]
        %v352 = vld [vmem:[#allocation5 + $0x188] sm:$0xff]
        %v353 = vld [vmem:[#allocation5 + $0x190] sm:$0xff]
        %v354 = vld [vmem:[#allocation5 + $0x198] sm:$0xff]
        %v355 = vld [vmem:[#allocation5 + $0x1a0] sm:$0xff]
        %v356 = vld [vmem:[#allocation5 + $0x1a8] sm:$0xff]
        %v357 = vld [vmem:[#allocation5 + $0x1b0] sm:$0xff]
        %v358 = vld [vmem:[#allocation5 + $0x1b8] sm:$0xff]
        %v359 = vld [vmem:[#allocation5 + $0x1c0] sm:$0xff]
        %v360 = vld [vmem:[#allocation5 + $0x1c8] sm:$0xff]
        %v361 = vld [vmem:[#allocation5 + $0x1d0] sm:$0xff]
        %v362 = vld [vmem:[#allocation5 + $0x1d8] sm:$0xff]
        %v363 = vld [vmem:[#allocation5 + $0x1e0] sm:$0xff]
        %v364 = vld [vmem:[#allocation5 + $0x1e8] sm:$0xff]
        %v365 = vld [vmem:[#allocation5 + $0x1f0] sm:$0xff]
        %v366 = vld [vmem:[#allocation5 + $0x1f8] sm:$0xff]
        %v367 = vld [vmem:[#allocation5 + $0x200] sm:$0xff]
        %v368 = vld [vmem:[#allocation5 + $0x208] sm:$0xff]
        %v369 = vld [vmem:[#allocation5 + $0x210] sm:$0xff]
        %v370 = vld [vmem:[#allocation5 + $0x218] sm:$0xff]
        %v371 = vld [vmem:[#allocation5 + $0x220] sm:$0xff]
        %v372 = vld [vmem:[#allocation5 + $0x228] sm:$0xff]
        %v373 = vld [vmem:[#allocation5 + $0x230] sm:$0xff]
        %v374 = vld [vmem:[#allocation5 + $0x238] sm:$0xff]
        %v375 = vld [vmem:[#allocation5 + $0x240] sm:$0xff]
        %v376 = vld [vmem:[#allocation5 + $0x248] sm:$0xff]
        %v377 = vld [vmem:[#allocation5 + $0x250] sm:$0xff]
        %v378 = vld [vmem:[#allocation5 + $0x258] sm:$0xff]
        %v379 = vld [vmem:[#allocation5 + $0x260] sm:$0xff]
        %v380 = vld [vmem:[#allocation5 + $0x268] sm:$0xff]
        %v381 = vld [vmem:[#allocation5 + $0x270] sm:$0xff]
        %v382 = vld [vmem:[#allocation5 + $0x278] sm:$0xff]
        %v383 = vld [vmem:[#allocation5 + $0x280] sm:$0xff]
        %v384 = vld [vmem:[#allocation5 + $0x288] sm:$0xff]
        %v385 = vld [vmem:[#allocation5 + $0x290] sm:$0xff]
        %v386 = vld [vmem:[#allocation5 + $0x298] sm:$0xff]
        %v387 = vld [vmem:[#allocation5 + $0x2a0] sm:$0xff]
        %v388 = vld [vmem:[#allocation5 + $0x2a8] sm:$0xff]
        %v389 = vld [vmem:[#allocation5 + $0x2b0] sm:$0xff]
        %v390 = vld [vmem:[#allocation5 + $0x2b8] sm:$0xff]
        %v391 = vld [vmem:[#allocation5 + $0x2c0] sm:$0xff]
        %v392 = vld [vmem:[#allocation5 + $0x2c8] sm:$0xff]
        %v393 = vld [vmem:[#allocation5 + $0x2d0] sm:$0xff]
        %v394 = vld [vmem:[#allocation5 + $0x2d8] sm:$0xff]
        %v395 = vld [vmem:[#allocation5 + $0x2e0] sm:$0xff]
        %v396 = vld [vmem:[#allocation5 + $0x2e8] sm:$0xff]
        %v397 = vld [vmem:[#allocation5 + $0x2f0] sm:$0xff]
        %v398 = vld [vmem:[#allocation5 + $0x2f8] sm:$0xff]
        %v399 = vld [vmem:[#allocation5 + $0x300] sm:$0xff]
        %v400 = vld [vmem:[#allocation5 + $0x308] sm:$0xff]
        %v401 = vld [vmem:[#allocation5 + $0x310] sm:$0xff]
        %v402 = vld [vmem:[#allocation5 + $0x318] sm:$0xff]
        %v403 = vld [vmem:[#allocation5 + $0x320] sm:$0xff]
        %v404 = vld [vmem:[#allocation5 + $0x328] sm:$0xff]
        %v405 = vld [vmem:[#allocation5 + $0x330] sm:$0xff]
        %v406 = vld [vmem:[#allocation5 + $0x338] sm:$0xff]
        %v407 = vld [vmem:[#allocation5 + $0x340] sm:$0xff]
        %v408 = vld [vmem:[#allocation5 + $0x348] sm:$0xff]
        %v409 = vld [vmem:[#allocation5 + $0x350] sm:$0xff]
        %v410 = vld [vmem:[#allocation5 + $0x358] sm:$0xff]
        %v411 = vld [vmem:[#allocation5 + $0x360] sm:$0xff]
        %v412 = vld [vmem:[#allocation5 + $0x368] sm:$0xff]
        %v413 = vld [vmem:[#allocation5 + $0x370] sm:$0xff]
        %v414 = vld [vmem:[#allocation5 + $0x378] sm:$0xff]
        %v415 = vld [vmem:[#allocation5 + $0x380] sm:$0xff]
        %v416 = vld [vmem:[#allocation5 + $0x388] sm:$0xff]
        %v417 = vld [vmem:[#allocation5 + $0x390] sm:$0xff]
        %v418 = vld [vmem:[#allocation5 + $0x398] sm:$0xff]
        %v419 = vld [vmem:[#allocation5 + $0x3a0] sm:$0xff]
        %v420 = vld [vmem:[#allocation5 + $0x3a8] sm:$0xff]
        %v421 = vld [vmem:[#allocation5 + $0x3b0] sm:$0xff]
        %v422 = vld [vmem:[#allocation5 + $0x3b8] sm:$0xff]
        %v423 = vld [vmem:[#allocation5 + $0x3c0] sm:$0xff]
        %v424 = vld [vmem:[#allocation5 + $0x3c8] sm:$0xff]
        %v425 = vld [vmem:[#allocation5 + $0x3d0] sm:$0xff]
        %v426 = vld [vmem:[#allocation5 + $0x3d8] sm:$0xff]
        %v427 = vld [vmem:[#allocation5 + $0x3e0] sm:$0xff]
        %v428 = vld [vmem:[#allocation5 + $0x3e8] sm:$0xff]
        %v429 = vld [vmem:[#allocation5 + $0x3f0] sm:$0xff]
        %v430 = vld [vmem:[#allocation5 + $0x3f8] sm:$0xff]
        %v431 = vld [vmem:[#allocation5 + $0x400] sm:$0xff]
        %v432 = vld [vmem:[#allocation5 + $0x408] sm:$0xff]
        %v433 = vld [vmem:[#allocation5 + $0x410] sm:$0xff]
        %v434 = vld [vmem:[#allocation5 + $0x418] sm:$0xff]
        %v435 = vld [vmem:[#allocation5 + $0x420] sm:$0xff]
        %v436 = vld [vmem:[#allocation5 + $0x428] sm:$0xff]
        %v437 = vld [vmem:[#allocation5 + $0x430] sm:$0xff]
        %v438 = vld [vmem:[#allocation5 + $0x438] sm:$0xff]
        %v439 = vld [vmem:[#allocation5 + $0x440] sm:$0xff]
        %v440 = vld [vmem:[#allocation5 + $0x448] sm:$0xff]
        %v441 = vld [vmem:[#allocation5 + $0x450] sm:$0xff]
        %v442 = vld [vmem:[#allocation5 + $0x458] sm:$0xff]
        %v443 = vld [vmem:[#allocation5 + $0x460] sm:$0xff]
        %v444 = vld [vmem:[#allocation5 + $0x468] sm:$0xff]
        %v445 = vld [vmem:[#allocation5 + $0x470] sm:$0xff]
        %v446 = vld [vmem:[#allocation5 + $0x478] sm:$0xff]
        %v447 = vld [vmem:[#allocation5 + $0x480] sm:$0xff]
        %v448 = vld [vmem:[#allocation5 + $0x488] sm:$0xff]
        %v449 = vld [vmem:[#allocation5 + $0x490] sm:$0xff]
        %v450 = vld [vmem:[#allocation5 + $0x498] sm:$0xff]
        %v451 = vld [vmem:[#allocation5 + $0x4a0] sm:$0xff]
        %v452 = vld [vmem:[#allocation5 + $0x4a8] sm:$0xff]
        %v453 = vld [vmem:[#allocation5 + $0x4b0] sm:$0xff]
        %v454 = vld [vmem:[#allocation5 + $0x4b8] sm:$0xff]
        %v455 = vld [vmem:[#allocation5 + $0x4c0] sm:$0xff]
        %v456 = vld [vmem:[#allocation5 + $0x4c8] sm:$0xff]
        %v457 = vld [vmem:[#allocation5 + $0x4d0] sm:$0xff]
        %v458 = vld [vmem:[#allocation5 + $0x4d8] sm:$0xff]
        %v459 = vld [vmem:[#allocation5 + $0x4e0] sm:$0xff]
        %v460 = vld [vmem:[#allocation5 + $0x4e8] sm:$0xff]
        %v461 = vld [vmem:[#allocation5 + $0x4f0] sm:$0xff]
        %v462 = vld [vmem:[#allocation5 + $0x4f8] sm:$0xff]
        %v463 = vld [vmem:[#allocation5 + $0x500] sm:$0xff]
        %v464 = vld [vmem:[#allocation5 + $0x508] sm:$0xff]
        %v465 = vld [vmem:[#allocation5 + $0x510] sm:$0xff]
        %v466 = vld [vmem:[#allocation5 + $0x518] sm:$0xff]
        %v467 = vld [vmem:[#allocation5 + $0x520] sm:$0xff]
        %v468 = vld [vmem:[#allocation5 + $0x528] sm:$0xff]
        %v469 = vld [vmem:[#allocation5 + $0x530] sm:$0xff]
        %v470 = vld [vmem:[#allocation5 + $0x538] sm:$0xff]
        %v471 = vld [vmem:[#allocation5 + $0x540] sm:$0xff]
        %v472 = vld [vmem:[#allocation5 + $0x548] sm:$0xff]
        %v473 = vld [vmem:[#allocation5 + $0x550] sm:$0xff]
        %v474 = vld [vmem:[#allocation5 + $0x558] sm:$0xff]
        %v475 = vld [vmem:[#allocation5 + $0x560] sm:$0xff]
        %v476 = vld [vmem:[#allocation5 + $0x568] sm:$0xff]
        %v477 = vld [vmem:[#allocation5 + $0x570] sm:$0xff]
        %v478 = vld [vmem:[#allocation5 + $0x578] sm:$0xff]
        %v479 = vld [vmem:[#allocation5 + $0x580] sm:$0xff]
        %v480 = vld [vmem:[#allocation5 + $0x588] sm:$0xff]
        %v481 = vld [vmem:[#allocation5 + $0x590] sm:$0xff]
        %v482 = vld [vmem:[#allocation5 + $0x598] sm:$0xff]
        %v483 = vld [vmem:[#allocation5 + $0x5a0] sm:$0xff]
        %v484 = vld [vmem:[#allocation5 + $0x5a8] sm:$0xff]
        %v485 = vld [vmem:[#allocation5 + $0x5b0] sm:$0xff]
        %v486 = vld [vmem:[#allocation5 + $0x5b8] sm:$0xff]
        %v487 = vld [vmem:[#allocation5 + $0x5c0] sm:$0xff]
        %v488 = vld [vmem:[#allocation5 + $0x5c8] sm:$0xff]
        %v489 = vld [vmem:[#allocation5 + $0x5d0] sm:$0xff]
        %v490 = vld [vmem:[#allocation5 + $0x5d8] sm:$0xff]
        %v491 = vld [vmem:[#allocation5 + $0x5e0] sm:$0xff]
        %v492 = vld [vmem:[#allocation5 + $0x5e8] sm:$0xff]
        %v493 = vld [vmem:[#allocation5 + $0x5f0] sm:$0xff]
        %v494 = vld [vmem:[#allocation5 + $0x5f8] sm:$0xff]
        %v495 = vld [vmem:[#allocation7] sm:$0xf]
        %v497 = vperm.slane %v495, 0
        %v498 = vperm.slane %v495, 1
        %v499 = vperm.slane %v495, 2
        %v500 = vperm.slane %v495, 3
        %v697 = vunpack.c.l.b16 %v303
        %v698 = vunpack.c.h.b16 %v303
        %v699 = vunpack.c.l.b16 %v304
        %v700 = vunpack.c.h.b16 %v304
        %v701 = vunpack.c.l.b16 %v305
        %v702 = vunpack.c.h.b16 %v305
        %v703 = vunpack.c.l.b16 %v306
        %v704 = vunpack.c.h.b16 %v306
        %v705 = vunpack.c.l.b16 %v307
        %v706 = vunpack.c.h.b16 %v307
        %v707 = vunpack.c.l.b16 %v308
        %v708 = vunpack.c.h.b16 %v308
        %v709 = vunpack.c.l.b16 %v309
        %v710 = vunpack.c.h.b16 %v309
        %v711 = vunpack.c.l.b16 %v310
        %v712 = vunpack.c.h.b16 %v310
        %v713 = vunpack.c.l.b16 %v311
        %v714 = vunpack.c.h.b16 %v311
        %v715 = vunpack.c.l.b16 %v312
        %v716 = vunpack.c.h.b16 %v312
        %v717 = vunpack.c.l.b16 %v313
        %v718 = vunpack.c.h.b16 %v313
        %v719 = vunpack.c.l.b16 %v314
        %v720 = vunpack.c.h.b16 %v314
        %v721 = vunpack.c.l.b16 %v315
        %v722 = vunpack.c.h.b16 %v315
        %v723 = vunpack.c.l.b16 %v316
        %v724 = vunpack.c.h.b16 %v316
        %v725 = vunpack.c.l.b16 %v317
        %v726 = vunpack.c.h.b16 %v317
        %v727 = vunpack.c.l.b16 %v318
        %v728 = vunpack.c.h.b16 %v318
        %v729 = vunpack.c.l.b16 %v319
        %v730 = vunpack.c.h.b16 %v319
        %v731 = vunpack.c.l.b16 %v320
        %v732 = vunpack.c.h.b16 %v320
        %v733 = vunpack.c.l.b16 %v321
        %v734 = vunpack.c.h.b16 %v321
        %v735 = vunpack.c.l.b16 %v322
        %v736 = vunpack.c.h.b16 %v322
        %v737 = vunpack.c.l.b16 %v323
        %v738 = vunpack.c.h.b16 %v323
        %v739 = vunpack.c.l.b16 %v324
        %v740 = vunpack.c.h.b16 %v324
        %v741 = vunpack.c.l.b16 %v325
        %v742 = vunpack.c.h.b16 %v325
        %v743 = vunpack.c.l.b16 %v326
        %v744 = vunpack.c.h.b16 %v326
        %v745 = vunpack.c.l.b16 %v327
        %v746 = vunpack.c.h.b16 %v327
        %v747 = vunpack.c.l.b16 %v328
        %v748 = vunpack.c.h.b16 %v328
        %v749 = vunpack.c.l.b16 %v329
        %v750 = vunpack.c.h.b16 %v329
        %v751 = vunpack.c.l.b16 %v330
        %v752 = vunpack.c.h.b16 %v330
        %v753 = vunpack.c.l.b16 %v331
        %v754 = vunpack.c.h.b16 %v331
        %v755 = vunpack.c.l.b16 %v332
        %v756 = vunpack.c.h.b16 %v332
        %v757 = vunpack.c.l.b16 %v333
        %v758 = vunpack.c.h.b16 %v333
        %v759 = vunpack.c.l.b16 %v334
        %v760 = vunpack.c.h.b16 %v334
        %v761 = vunpack.c.l.b16 %v335
        %v762 = vunpack.c.h.b16 %v335
        %v763 = vunpack.c.l.b16 %v336
        %v764 = vunpack.c.h.b16 %v336
        %v765 = vunpack.c.l.b16 %v337
        %v766 = vunpack.c.h.b16 %v337
        %v767 = vunpack.c.l.b16 %v338
        %v768 = vunpack.c.h.b16 %v338
        %v769 = vunpack.c.l.b16 %v339
        %v770 = vunpack.c.h.b16 %v339
        %v771 = vunpack.c.l.b16 %v340
        %v772 = vunpack.c.h.b16 %v340
        %v773 = vunpack.c.l.b16 %v341
        %v774 = vunpack.c.h.b16 %v341
        %v775 = vunpack.c.l.b16 %v342
        %v776 = vunpack.c.h.b16 %v342
        %v777 = vunpack.c.l.b16 %v343
        %v778 = vunpack.c.h.b16 %v343
        %v779 = vunpack.c.l.b16 %v344
        %v780 = vunpack.c.h.b16 %v344
        %v781 = vunpack.c.l.b16 %v345
        %v782 = vunpack.c.h.b16 %v345
        %v783 = vunpack.c.l.b16 %v346
        %v784 = vunpack.c.h.b16 %v346
        %v785 = vunpack.c.l.b16 %v347
        %v786 = vunpack.c.h.b16 %v347
        %v787 = vunpack.c.l.b16 %v348
        %v788 = vunpack.c.h.b16 %v348
        %v789 = vunpack.c.l.b16 %v349
        %v790 = vunpack.c.h.b16 %v349
        %v791 = vunpack.c.l.b16 %v350
        %v792 = vunpack.c.h.b16 %v350
        %v793 = vunpack.c.l.b16 %v351
        %v794 = vunpack.c.h.b16 %v351
        %v795 = vunpack.c.l.b16 %v352
        %v796 = vunpack.c.h.b16 %v352
        %v797 = vunpack.c.l.b16 %v353
        %v798 = vunpack.c.h.b16 %v353
        %v799 = vunpack.c.l.b16 %v354
        %v800 = vunpack.c.h.b16 %v354
        %v801 = vunpack.c.l.b16 %v355
        %v802 = vunpack.c.h.b16 %v355
        %v803 = vunpack.c.l.b16 %v356
        %v804 = vunpack.c.h.b16 %v356
        %v805 = vunpack.c.l.b16 %v357
        %v806 = vunpack.c.h.b16 %v357
        %v807 = vunpack.c.l.b16 %v358
        %v808 = vunpack.c.h.b16 %v358
        %v809 = vunpack.c.l.b16 %v359
        %v810 = vunpack.c.h.b16 %v359
        %v811 = vunpack.c.l.b16 %v360
        %v812 = vunpack.c.h.b16 %v360
        %v813 = vunpack.c.l.b16 %v361
        %v814 = vunpack.c.h.b16 %v361
        %v815 = vunpack.c.l.b16 %v362
        %v816 = vunpack.c.h.b16 %v362
        %v817 = vunpack.c.l.b16 %v363
        %v818 = vunpack.c.h.b16 %v363
        %v819 = vunpack.c.l.b16 %v364
        %v820 = vunpack.c.h.b16 %v364
        %v821 = vunpack.c.l.b16 %v365
        %v822 = vunpack.c.h.b16 %v365
        %v823 = vunpack.c.l.b16 %v366
        %v824 = vunpack.c.h.b16 %v366
        %v825 = vunpack.c.l.b16 %v367
        %v826 = vunpack.c.h.b16 %v367
        %v827 = vunpack.c.l.b16 %v368
        %v828 = vunpack.c.h.b16 %v368
        %v829 = vunpack.c.l.b16 %v369
        %v830 = vunpack.c.h.b16 %v369
        %v831 = vunpack.c.l.b16 %v370
        %v832 = vunpack.c.h.b16 %v370
        %v833 = vunpack.c.l.b16 %v371
        %v834 = vunpack.c.h.b16 %v371
        %v835 = vunpack.c.l.b16 %v372
        %v836 = vunpack.c.h.b16 %v372
        %v837 = vunpack.c.l.b16 %v373
        %v838 = vunpack.c.h.b16 %v373
        %v839 = vunpack.c.l.b16 %v374
        %v840 = vunpack.c.h.b16 %v374
        %v841 = vunpack.c.l.b16 %v375
        %v842 = vunpack.c.h.b16 %v375
        %v843 = vunpack.c.l.b16 %v376
        %v844 = vunpack.c.h.b16 %v376
        %v845 = vunpack.c.l.b16 %v377
        %v846 = vunpack.c.h.b16 %v377
        %v847 = vunpack.c.l.b16 %v378
        %v848 = vunpack.c.h.b16 %v378
        %v849 = vunpack.c.l.b16 %v379
        %v850 = vunpack.c.h.b16 %v379
        %v851 = vunpack.c.l.b16 %v380
        %v852 = vunpack.c.h.b16 %v380
        %v853 = vunpack.c.l.b16 %v381
        %v854 = vunpack.c.h.b16 %v381
        %v855 = vunpack.c.l.b16 %v382
        %v856 = vunpack.c.h.b16 %v382
        %v857 = vunpack.c.l.b16 %v383
        %v858 = vunpack.c.h.b16 %v383
        %v859 = vunpack.c.l.b16 %v384
        %v860 = vunpack.c.h.b16 %v384
        %v861 = vunpack.c.l.b16 %v385
        %v862 = vunpack.c.h.b16 %v385
        %v863 = vunpack.c.l.b16 %v386
        %v864 = vunpack.c.h.b16 %v386
        %v865 = vunpack.c.l.b16 %v387
        %v866 = vunpack.c.h.b16 %v387
        %v867 = vunpack.c.l.b16 %v388
        %v868 = vunpack.c.h.b16 %v388
        %v869 = vunpack.c.l.b16 %v389
        %v870 = vunpack.c.h.b16 %v389
        %v871 = vunpack.c.l.b16 %v390
        %v872 = vunpack.c.h.b16 %v390
        %v873 = vunpack.c.l.b16 %v391
        %v874 = vunpack.c.h.b16 %v391
        %v875 = vunpack.c.l.b16 %v392
        %v876 = vunpack.c.h.b16 %v392
        %v877 = vunpack.c.l.b16 %v393
        %v878 = vunpack.c.h.b16 %v393
        %v879 = vunpack.c.l.b16 %v394
        %v880 = vunpack.c.h.b16 %v394
        %v881 = vunpack.c.l.b16 %v395
        %v882 = vunpack.c.h.b16 %v395
        %v883 = vunpack.c.l.b16 %v396
        %v884 = vunpack.c.h.b16 %v396
        %v885 = vunpack.c.l.b16 %v397
        %v886 = vunpack.c.h.b16 %v397
        %v887 = vunpack.c.l.b16 %v398
        %v888 = vunpack.c.h.b16 %v398
        %v889 = vunpack.c.l.b16 %v399
        %v890 = vunpack.c.h.b16 %v399
        %v891 = vunpack.c.l.b16 %v400
        %v892 = vunpack.c.h.b16 %v400
        %v893 = vunpack.c.l.b16 %v401
        %v894 = vunpack.c.h.b16 %v401
        %v895 = vunpack.c.l.b16 %v402
        %v896 = vunpack.c.h.b16 %v402
        %v897 = vunpack.c.l.b16 %v403
        %v898 = vunpack.c.h.b16 %v403
        %v899 = vunpack.c.l.b16 %v404
        %v900 = vunpack.c.h.b16 %v404
        %v901 = vunpack.c.l.b16 %v405
        %v902 = vunpack.c.h.b16 %v405
        %v903 = vunpack.c.l.b16 %v406
        %v904 = vunpack.c.h.b16 %v406
        %v905 = vunpack.c.l.b16 %v407
        %v906 = vunpack.c.h.b16 %v407
        %v907 = vunpack.c.l.b16 %v408
        %v908 = vunpack.c.h.b16 %v408
        %v909 = vunpack.c.l.b16 %v409
        %v910 = vunpack.c.h.b16 %v409
        %v911 = vunpack.c.l.b16 %v410
        %v912 = vunpack.c.h.b16 %v410
        %v913 = vunpack.c.l.b16 %v411
        %v914 = vunpack.c.h.b16 %v411
        %v915 = vunpack.c.l.b16 %v412
        %v916 = vunpack.c.h.b16 %v412
        %v917 = vunpack.c.l.b16 %v413
        %v918 = vunpack.c.h.b16 %v413
        %v919 = vunpack.c.l.b16 %v414
        %v920 = vunpack.c.h.b16 %v414
        %v921 = vunpack.c.l.b16 %v415
        %v922 = vunpack.c.h.b16 %v415
        %v923 = vunpack.c.l.b16 %v416
        %v924 = vunpack.c.h.b16 %v416
        %v925 = vunpack.c.l.b16 %v417
        %v926 = vunpack.c.h.b16 %v417
        %v927 = vunpack.c.l.b16 %v418
        %v928 = vunpack.c.h.b16 %v418
        %v929 = vunpack.c.l.b16 %v419
        %v930 = vunpack.c.h.b16 %v419
        %v931 = vunpack.c.l.b16 %v420
        %v932 = vunpack.c.h.b16 %v420
        %v933 = vunpack.c.l.b16 %v421
        %v934 = vunpack.c.h.b16 %v421
        %v935 = vunpack.c.l.b16 %v422
        %v936 = vunpack.c.h.b16 %v422
        %v937 = vunpack.c.l.b16 %v423
        %v938 = vunpack.c.h.b16 %v423
        %v939 = vunpack.c.l.b16 %v424
        %v940 = vunpack.c.h.b16 %v424
        %v941 = vunpack.c.l.b16 %v425
        %v942 = vunpack.c.h.b16 %v425
        %v943 = vunpack.c.l.b16 %v426
        %v944 = vunpack.c.h.b16 %v426
        %v945 = vunpack.c.l.b16 %v427
        %v946 = vunpack.c.h.b16 %v427
        %v947 = vunpack.c.l.b16 %v428
        %v948 = vunpack.c.h.b16 %v428
        %v949 = vunpack.c.l.b16 %v429
        %v950 = vunpack.c.h.b16 %v429
        %v951 = vunpack.c.l.b16 %v430
        %v952 = vunpack.c.h.b16 %v430
        %v953 = vunpack.c.l.b16 %v431
        %v954 = vunpack.c.h.b16 %v431
        %v955 = vunpack.c.l.b16 %v432
        %v956 = vunpack.c.h.b16 %v432
        %v957 = vunpack.c.l.b16 %v433
        %v958 = vunpack.c.h.b16 %v433
        %v959 = vunpack.c.l.b16 %v434
        %v960 = vunpack.c.h.b16 %v434
        %v961 = vunpack.c.l.b16 %v435
        %v962 = vunpack.c.h.b16 %v435
        %v963 = vunpack.c.l.b16 %v436
        %v964 = vunpack.c.h.b16 %v436
        %v965 = vunpack.c.l.b16 %v437
        %v966 = vunpack.c.h.b16 %v437
        %v967 = vunpack.c.l.b16 %v438
        %v968 = vunpack.c.h.b16 %v438
        %v969 = vunpack.c.l.b16 %v439
        %v970 = vunpack.c.h.b16 %v439
        %v971 = vunpack.c.l.b16 %v440
        %v972 = vunpack.c.h.b16 %v440
        %v973 = vunpack.c.l.b16 %v441
        %v974 = vunpack.c.h.b16 %v441
        %v975 = vunpack.c.l.b16 %v442
        %v976 = vunpack.c.h.b16 %v442
        %v977 = vunpack.c.l.b16 %v443
        %v978 = vunpack.c.h.b16 %v443
        %v979 = vunpack.c.l.b16 %v444
        %v980 = vunpack.c.h.b16 %v444
        %v981 = vunpack.c.l.b16 %v445
        %v982 = vunpack.c.h.b16 %v445
        %v983 = vunpack.c.l.b16 %v446
        %v984 = vunpack.c.h.b16 %v446
        %v985 = vunpack.c.l.b16 %v447
        %v986 = vunpack.c.h.b16 %v447
        %v987 = vunpack.c.l.b16 %v448
        %v988 = vunpack.c.h.b16 %v448
        %v989 = vunpack.c.l.b16 %v449
        %v990 = vunpack.c.h.b16 %v449
        %v991 = vunpack.c.l.b16 %v450
        %v992 = vunpack.c.h.b16 %v450
        %v993 = vunpack.c.l.b16 %v451
        %v994 = vunpack.c.h.b16 %v451
        %v995 = vunpack.c.l.b16 %v452
        %v996 = vunpack.c.h.b16 %v452
        %v997 = vunpack.c.l.b16 %v453
        %v998 = vunpack.c.h.b16 %v453
        %v999 = vunpack.c.l.b16 %v454
        %v1000 = vunpack.c.h.b16 %v454
        %v1001 = vunpack.c.l.b16 %v455
        %v1002 = vunpack.c.h.b16 %v455
        %v1003 = vunpack.c.l.b16 %v456
        %v1004 = vunpack.c.h.b16 %v456
        %v1005 = vunpack.c.l.b16 %v457
        %v1006 = vunpack.c.h.b16 %v457
        %v1007 = vunpack.c.l.b16 %v458
        %v1008 = vunpack.c.h.b16 %v458
        %v1009 = vunpack.c.l.b16 %v459
        %v1010 = vunpack.c.h.b16 %v459
        %v1011 = vunpack.c.l.b16 %v460
        %v1012 = vunpack.c.h.b16 %v460
        %v1013 = vunpack.c.l.b16 %v461
        %v1014 = vunpack.c.h.b16 %v461
        %v1015 = vunpack.c.l.b16 %v462
        %v1016 = vunpack.c.h.b16 %v462
        %v1017 = vunpack.c.l.b16 %v463
        %v1018 = vunpack.c.h.b16 %v463
        %v1019 = vunpack.c.l.b16 %v464
        %v1020 = vunpack.c.h.b16 %v464
        %v1021 = vunpack.c.l.b16 %v465
        %v1022 = vunpack.c.h.b16 %v465
        %v1023 = vunpack.c.l.b16 %v466
        %v1024 = vunpack.c.h.b16 %v466
        %v1025 = vunpack.c.l.b16 %v467
        %v1026 = vunpack.c.h.b16 %v467
        %v1027 = vunpack.c.l.b16 %v468
        %v1028 = vunpack.c.h.b16 %v468
        %v1029 = vunpack.c.l.b16 %v469
        %v1030 = vunpack.c.h.b16 %v469
        %v1031 = vunpack.c.l.b16 %v470
        %v1032 = vunpack.c.h.b16 %v470
        %v1033 = vunpack.c.l.b16 %v471
        %v1034 = vunpack.c.h.b16 %v471
        %v1035 = vunpack.c.l.b16 %v472
        %v1036 = vunpack.c.h.b16 %v472
        %v1037 = vunpack.c.l.b16 %v473
        %v1038 = vunpack.c.h.b16 %v473
        %v1039 = vunpack.c.l.b16 %v474
        %v1040 = vunpack.c.h.b16 %v474
        %v1041 = vunpack.c.l.b16 %v475
        %v1042 = vunpack.c.h.b16 %v475
        %v1043 = vunpack.c.l.b16 %v476
        %v1044 = vunpack.c.h.b16 %v476
        %v1045 = vunpack.c.l.b16 %v477
        %v1046 = vunpack.c.h.b16 %v477
        %v1047 = vunpack.c.l.b16 %v478
        %v1048 = vunpack.c.h.b16 %v478
        %v1049 = vunpack.c.l.b16 %v479
        %v1050 = vunpack.c.h.b16 %v479
        %v1051 = vunpack.c.l.b16 %v480
        %v1052 = vunpack.c.h.b16 %v480
        %v1053 = vunpack.c.l.b16 %v481
        %v1054 = vunpack.c.h.b16 %v481
        %v1055 = vunpack.c.l.b16 %v482
        %v1056 = vunpack.c.h.b16 %v482
        %v1057 = vunpack.c.l.b16 %v483
        %v1058 = vunpack.c.h.b16 %v483
        %v1059 = vunpack.c.l.b16 %v484
        %v1060 = vunpack.c.h.b16 %v484
        %v1061 = vunpack.c.l.b16 %v485
        %v1062 = vunpack.c.h.b16 %v485
        %v1063 = vunpack.c.l.b16 %v486
        %v1064 = vunpack.c.h.b16 %v486
        %v1065 = vunpack.c.l.b16 %v487
        %v1066 = vunpack.c.h.b16 %v487
        %v1067 = vunpack.c.l.b16 %v488
        %v1068 = vunpack.c.h.b16 %v488
        %v1069 = vunpack.c.l.b16 %v489
        %v1070 = vunpack.c.h.b16 %v489
        %v1071 = vunpack.c.l.b16 %v490
        %v1072 = vunpack.c.h.b16 %v490
        %v1073 = vunpack.c.l.b16 %v491
        %v1074 = vunpack.c.h.b16 %v491
        %v1075 = vunpack.c.l.b16 %v492
        %v1076 = vunpack.c.h.b16 %v492
        %v1077 = vunpack.c.l.b16 %v493
        %v1078 = vunpack.c.h.b16 %v493
        %v1079 = vunpack.c.l.b16 %v494
        %v1080 = vunpack.c.h.b16 %v494
        %v1081 = vpack.c.b16 %v701, %v697
        %v1082 = vpack.c.b16 %v702, %v698
        %v1083 = vpack.c.b16 %v703, %v699
        %v1084 = vpack.c.b16 %v704, %v700
        %v1085 = vpack.c.b16 %v709, %v705
        %v1086 = vpack.c.b16 %v710, %v706
        %v1087 = vpack.c.b16 %v711, %v707
        %v1088 = vpack.c.b16 %v712, %v708
        %v1089 = vpack.c.b16 %v717, %v713
        %v1090 = vpack.c.b16 %v718, %v714
        %v1091 = vpack.c.b16 %v719, %v715
        %v1092 = vpack.c.b16 %v720, %v716
        %v1093 = vpack.c.b16 %v725, %v721
        %v1094 = vpack.c.b16 %v726, %v722
        %v1095 = vpack.c.b16 %v727, %v723
        %v1096 = vpack.c.b16 %v728, %v724
        %v1097 = vpack.c.b16 %v733, %v729
        %v1098 = vpack.c.b16 %v734, %v730
        %v1099 = vpack.c.b16 %v735, %v731
        %v1100 = vpack.c.b16 %v736, %v732
        %v1101 = vpack.c.b16 %v741, %v737
        %v1102 = vpack.c.b16 %v742, %v738
        %v1103 = vpack.c.b16 %v743, %v739
        %v1104 = vpack.c.b16 %v744, %v740
        %v1105 = vpack.c.b16 %v749, %v745
        %v1106 = vpack.c.b16 %v750, %v746
        %v1107 = vpack.c.b16 %v751, %v747
        %v1108 = vpack.c.b16 %v752, %v748
        %v1109 = vpack.c.b16 %v757, %v753
        %v1110 = vpack.c.b16 %v758, %v754
        %v1111 = vpack.c.b16 %v759, %v755
        %v1112 = vpack.c.b16 %v760, %v756
        %v1113 = vpack.c.b16 %v765, %v761
        %v1114 = vpack.c.b16 %v766, %v762
        %v1115 = vpack.c.b16 %v767, %v763
        %v1116 = vpack.c.b16 %v768, %v764
        %v1117 = vpack.c.b16 %v773, %v769
        %v1118 = vpack.c.b16 %v774, %v770
        %v1119 = vpack.c.b16 %v775, %v771
        %v1120 = vpack.c.b16 %v776, %v772
        %v1121 = vpack.c.b16 %v781, %v777
        %v1122 = vpack.c.b16 %v782, %v778
        %v1123 = vpack.c.b16 %v783, %v779
        %v1124 = vpack.c.b16 %v784, %v780
        %v1125 = vpack.c.b16 %v789, %v785
        %v1126 = vpack.c.b16 %v790, %v786
        %v1127 = vpack.c.b16 %v791, %v787
        %v1128 = vpack.c.b16 %v792, %v788
        %v1129 = vpack.c.b16 %v797, %v793
        %v1130 = vpack.c.b16 %v798, %v794
        %v1131 = vpack.c.b16 %v799, %v795
        %v1132 = vpack.c.b16 %v800, %v796
        %v1133 = vpack.c.b16 %v805, %v801
        %v1134 = vpack.c.b16 %v806, %v802
        %v1135 = vpack.c.b16 %v807, %v803
        %v1136 = vpack.c.b16 %v808, %v804
        %v1137 = vpack.c.b16 %v813, %v809
        %v1138 = vpack.c.b16 %v814, %v810
        %v1139 = vpack.c.b16 %v815, %v811
        %v1140 = vpack.c.b16 %v816, %v812
        %v1141 = vpack.c.b16 %v821, %v817
        %v1142 = vpack.c.b16 %v822, %v818
        %v1143 = vpack.c.b16 %v823, %v819
        %v1144 = vpack.c.b16 %v824, %v820
        %v1145 = vpack.c.b16 %v829, %v825
        %v1146 = vpack.c.b16 %v830, %v826
        %v1147 = vpack.c.b16 %v831, %v827
        %v1148 = vpack.c.b16 %v832, %v828
        %v1149 = vpack.c.b16 %v837, %v833
        %v1150 = vpack.c.b16 %v838, %v834
        %v1151 = vpack.c.b16 %v839, %v835
        %v1152 = vpack.c.b16 %v840, %v836
        %v1153 = vpack.c.b16 %v845, %v841
        %v1154 = vpack.c.b16 %v846, %v842
        %v1155 = vpack.c.b16 %v847, %v843
        %v1156 = vpack.c.b16 %v848, %v844
        %v1157 = vpack.c.b16 %v853, %v849
        %v1158 = vpack.c.b16 %v854, %v850
        %v1159 = vpack.c.b16 %v855, %v851
        %v1160 = vpack.c.b16 %v856, %v852
        %v1161 = vpack.c.b16 %v861, %v857
        %v1162 = vpack.c.b16 %v862, %v858
        %v1163 = vpack.c.b16 %v863, %v859
        %v1164 = vpack.c.b16 %v864, %v860
        %v1165 = vpack.c.b16 %v869, %v865
        %v1166 = vpack.c.b16 %v870, %v866
        %v1167 = vpack.c.b16 %v871, %v867
        %v1168 = vpack.c.b16 %v872, %v868
        %v1169 = vpack.c.b16 %v877, %v873
        %v1170 = vpack.c.b16 %v878, %v874
        %v1171 = vpack.c.b16 %v879, %v875
        %v1172 = vpack.c.b16 %v880, %v876
        %v1173 = vpack.c.b16 %v885, %v881
        %v1174 = vpack.c.b16 %v886, %v882
        %v1175 = vpack.c.b16 %v887, %v883
        %v1176 = vpack.c.b16 %v888, %v884
        %v1177 = vpack.c.b16 %v893, %v889
        %v1178 = vpack.c.b16 %v894, %v890
        %v1179 = vpack.c.b16 %v895, %v891
        %v1180 = vpack.c.b16 %v896, %v892
        %v1181 = vpack.c.b16 %v901, %v897
        %v1182 = vpack.c.b16 %v902, %v898
        %v1183 = vpack.c.b16 %v903, %v899
        %v1184 = vpack.c.b16 %v904, %v900
        %v1185 = vpack.c.b16 %v909, %v905
        %v1186 = vpack.c.b16 %v910, %v906
        %v1187 = vpack.c.b16 %v911, %v907
        %v1188 = vpack.c.b16 %v912, %v908
        %v1189 = vpack.c.b16 %v917, %v913
        %v1190 = vpack.c.b16 %v918, %v914
        %v1191 = vpack.c.b16 %v919, %v915
        %v1192 = vpack.c.b16 %v920, %v916
        %v1193 = vpack.c.b16 %v925, %v921
        %v1194 = vpack.c.b16 %v926, %v922
        %v1195 = vpack.c.b16 %v927, %v923
        %v1196 = vpack.c.b16 %v928, %v924
        %v1197 = vpack.c.b16 %v933, %v929
        %v1198 = vpack.c.b16 %v934, %v930
        %v1199 = vpack.c.b16 %v935, %v931
        %v1200 = vpack.c.b16 %v936, %v932
        %v1201 = vpack.c.b16 %v941, %v937
        %v1202 = vpack.c.b16 %v942, %v938
        %v1203 = vpack.c.b16 %v943, %v939
        %v1204 = vpack.c.b16 %v944, %v940
        %v1205 = vpack.c.b16 %v949, %v945
        %v1206 = vpack.c.b16 %v950, %v946
        %v1207 = vpack.c.b16 %v951, %v947
        %v1208 = vpack.c.b16 %v952, %v948
        %v1209 = vpack.c.b16 %v957, %v953
        %v1210 = vpack.c.b16 %v958, %v954
        %v1211 = vpack.c.b16 %v959, %v955
        %v1212 = vpack.c.b16 %v960, %v956
        %v1213 = vpack.c.b16 %v965, %v961
        %v1214 = vpack.c.b16 %v966, %v962
        %v1215 = vpack.c.b16 %v967, %v963
        %v1216 = vpack.c.b16 %v968, %v964
        %v1217 = vpack.c.b16 %v973, %v969
        %v1218 = vpack.c.b16 %v974, %v970
        %v1219 = vpack.c.b16 %v975, %v971
        %v1220 = vpack.c.b16 %v976, %v972
        %v1221 = vpack.c.b16 %v981, %v977
        %v1222 = vpack.c.b16 %v982, %v978
        %v1223 = vpack.c.b16 %v983, %v979
        %v1224 = vpack.c.b16 %v984, %v980
        %v1225 = vpack.c.b16 %v989, %v985
        %v1226 = vpack.c.b16 %v990, %v986
        %v1227 = vpack.c.b16 %v991, %v987
        %v1228 = vpack.c.b16 %v992, %v988
        %v1229 = vpack.c.b16 %v997, %v993
        %v1230 = vpack.c.b16 %v998, %v994
        %v1231 = vpack.c.b16 %v999, %v995
        %v1232 = vpack.c.b16 %v1000, %v996
        %v1233 = vpack.c.b16 %v1005, %v1001
        %v1234 = vpack.c.b16 %v1006, %v1002
        %v1235 = vpack.c.b16 %v1007, %v1003
        %v1236 = vpack.c.b16 %v1008, %v1004
        %v1237 = vpack.c.b16 %v1013, %v1009
        %v1238 = vpack.c.b16 %v1014, %v1010
        %v1239 = vpack.c.b16 %v1015, %v1011
        %v1240 = vpack.c.b16 %v1016, %v1012
        %v1241 = vpack.c.b16 %v1021, %v1017
        %v1242 = vpack.c.b16 %v1022, %v1018
        %v1243 = vpack.c.b16 %v1023, %v1019
        %v1244 = vpack.c.b16 %v1024, %v1020
        %v1245 = vpack.c.b16 %v1029, %v1025
        %v1246 = vpack.c.b16 %v1030, %v1026
        %v1247 = vpack.c.b16 %v1031, %v1027
        %v1248 = vpack.c.b16 %v1032, %v1028
        %v1249 = vpack.c.b16 %v1037, %v1033
        %v1250 = vpack.c.b16 %v1038, %v1034
        %v1251 = vpack.c.b16 %v1039, %v1035
        %v1252 = vpack.c.b16 %v1040, %v1036
        %v1253 = vpack.c.b16 %v1045, %v1041
        %v1254 = vpack.c.b16 %v1046, %v1042
        %v1255 = vpack.c.b16 %v1047, %v1043
        %v1256 = vpack.c.b16 %v1048, %v1044
        %v1257 = vpack.c.b16 %v1053, %v1049
        %v1258 = vpack.c.b16 %v1054, %v1050
        %v1259 = vpack.c.b16 %v1055, %v1051
        %v1260 = vpack.c.b16 %v1056, %v1052
        %v1261 = vpack.c.b16 %v1061, %v1057
        %v1262 = vpack.c.b16 %v1062, %v1058
        %v1263 = vpack.c.b16 %v1063, %v1059
        %v1264 = vpack.c.b16 %v1064, %v1060
        %v1265 = vpack.c.b16 %v1069, %v1065
        %v1266 = vpack.c.b16 %v1070, %v1066
        %v1267 = vpack.c.b16 %v1071, %v1067
        %v1268 = vpack.c.b16 %v1072, %v1068
        %v1269 = vpack.c.b16 %v1077, %v1073
        %v1270 = vpack.c.b16 %v1078, %v1074
        %v1271 = vpack.c.b16 %v1079, %v1075
        %v1272 = vpack.c.b16 %v1080, %v1076
        %1465 = vmatpush.bf16.msra.mxu0 %v1109
        %1466 = vmatpush.bf16.msra.mxu0 %v1105
        %1467 = vmatpush.bf16.msra.mxu0 %v1101
        %1468 = vmatpush.bf16.msra.mxu0 %v1097
        %1469 = vmatpush.bf16.msra.mxu0 %v1093
        %1470 = vmatpush.bf16.msra.mxu0 %v1089
        %1471 = vmatpush.bf16.msra.mxu0 %v1085
        %1472 = vmatpush.bf16.msra.mxu0 %v1081
        %1473 = vmatmul.bf16.gmra.mxu0 %v297
        %v1474 = vpop.f32.mrf.mxu0
        %v1475 = vadd.f32 %v497, %v1474
        %v1476 = vpop.f32.mrf.mxu0
        %1477 = vdwg.mxu0
        %1478 = vmatpush.bf16.msra.mxu0 %v1141
        %1479 = vmatpush.bf16.msra.mxu0 %v1137
        %1480 = vmatpush.bf16.msra.mxu0 %v1133
        %1481 = vmatpush.bf16.msra.mxu0 %v1129
        %1482 = vmatpush.bf16.msra.mxu0 %v1125
        %1483 = vmatpush.bf16.msra.mxu0 %v1121
        %1484 = vmatpush.bf16.msra.mxu0 %v1117
        %1485 = vmatpush.bf16.msra.mxu0 %v1113
        %1486 = vmatmul.bf16.gmra.mxu0 %v298
        %v1487 = vpop.f32.mrf.mxu0
        %v1488 = vadd.f32 %v1475, %v1487
        %v1489 = vpop.f32.mrf.mxu0
        %1490 = vdwg.mxu0
        %1491 = vmatpush.bf16.msra.mxu0 %v1173
        %1492 = vmatpush.bf16.msra.mxu0 %v1169
        %1493 = vmatpush.bf16.msra.mxu0 %v1165
        %1494 = vmatpush.bf16.msra.mxu0 %v1161
        %1495 = vmatpush.bf16.msra.mxu0 %v1157
        %1496 = vmatpush.bf16.msra.mxu0 %v1153
        %1497 = vmatpush.bf16.msra.mxu0 %v1149
        %1498 = vmatpush.bf16.msra.mxu0 %v1145
        %1499 = vmatmul.bf16.gmra.mxu0 %v299
        %v1500 = vpop.f32.mrf.mxu0
        %v1501 = vadd.f32 %v1488, %v1500
        %v1502 = vpop.f32.mrf.mxu0
        %1503 = vdwg.mxu0
        %1504 = vmatpush.bf16.msra.mxu0 %v1205
        %1505 = vmatpush.bf16.msra.mxu0 %v1201
        %1506 = vmatpush.bf16.msra.mxu0 %v1197
        %1507 = vmatpush.bf16.msra.mxu0 %v1193
        %1508 = vmatpush.bf16.msra.mxu0 %v1189
        %1509 = vmatpush.bf16.msra.mxu0 %v1185
        %1510 = vmatpush.bf16.msra.mxu0 %v1181
        %1511 = vmatpush.bf16.msra.mxu0 %v1177
        %1512 = vmatmul.bf16.gmra.mxu0 %v300
        %v1513 = vpop.f32.mrf.mxu0
        %v1514 = vadd.f32 %v1501, %v1513
        %v1515 = vpop.f32.mrf.mxu0
        %1516 = vdwg.mxu0
        %1517 = vmatpush.bf16.msra.mxu0 %v1237
        %1518 = vmatpush.bf16.msra.mxu0 %v1233
        %1519 = vmatpush.bf16.msra.mxu0 %v1229
        %1520 = vmatpush.bf16.msra.mxu0 %v1225
        %1521 = vmatpush.bf16.msra.mxu0 %v1221
        %1522 = vmatpush.bf16.msra.mxu0 %v1217
        %1523 = vmatpush.bf16.msra.mxu0 %v1213
        %1524 = vmatpush.bf16.msra.mxu0 %v1209
        %1525 = vmatmul.bf16.gmra.mxu0 %v301
        %v1526 = vpop.f32.mrf.mxu0
        %v1527 = vadd.f32 %v1514, %v1526
        %v1528 = vpop.f32.mrf.mxu0
        %1529 = vdwg.mxu0
        %1530 = vmatpush.bf16.msra.mxu0 %v1269
        %1531 = vmatpush.bf16.msra.mxu0 %v1265
        %1532 = vmatpush.bf16.msra.mxu0 %v1261
        %1533 = vmatpush.bf16.msra.mxu0 %v1257
        %1534 = vmatpush.bf16.msra.mxu0 %v1253
        %1535 = vmatpush.bf16.msra.mxu0 %v1249
        %1536 = vmatpush.bf16.msra.mxu0 %v1245
        %1537 = vmatpush.bf16.msra.mxu0 %v1241
        %1538 = vmatmul.bf16.gmra.mxu0 %v302
        %v1539 = vpop.f32.mrf.mxu0
        %v1540 = vadd.f32 %v1527, %v1539
        %v1541 = vpop.f32.mrf.mxu0
        %1542 = vdwg.mxu0
        %1543 = vmatpush.bf16.msra.mxu0 %v1110
        %1544 = vmatpush.bf16.msra.mxu0 %v1106
        %1545 = vmatpush.bf16.msra.mxu0 %v1102
        %1546 = vmatpush.bf16.msra.mxu0 %v1098
        %1547 = vmatpush.bf16.msra.mxu0 %v1094
        %1548 = vmatpush.bf16.msra.mxu0 %v1090
        %1549 = vmatpush.bf16.msra.mxu0 %v1086
        %1550 = vmatpush.bf16.msra.mxu0 %v1082
        %1551 = vmatmul.bf16.gmra.mxu0 %v297
        %v1552 = vpop.f32.mrf.mxu0
        %v1553 = vadd.f32 %v498, %v1552
        %v1554 = vpop.f32.mrf.mxu0
        %1555 = vdwg.mxu0
        %1556 = vmatpush.bf16.msra.mxu0 %v1142
        %1557 = vmatpush.bf16.msra.mxu0 %v1138
        %1558 = vmatpush.bf16.msra.mxu0 %v1134
        %1559 = vmatpush.bf16.msra.mxu0 %v1130
        %1560 = vmatpush.bf16.msra.mxu0 %v1126
        %1561 = vmatpush.bf16.msra.mxu0 %v1122
        %1562 = vmatpush.bf16.msra.mxu0 %v1118
        %1563 = vmatpush.bf16.msra.mxu0 %v1114
        %1564 = vmatmul.bf16.gmra.mxu0 %v298
        %v1565 = vpop.f32.mrf.mxu0
        %v1566 = vadd.f32 %v1553, %v1565
        %v1567 = vpop.f32.mrf.mxu0
        %1568 = vdwg.mxu0
        %1569 = vmatpush.bf16.msra.mxu0 %v1174
        %1570 = vmatpush.bf16.msra.mxu0 %v1170
        %1571 = vmatpush.bf16.msra.mxu0 %v1166
        %1572 = vmatpush.bf16.msra.mxu0 %v1162
        %1573 = vmatpush.bf16.msra.mxu0 %v1158
        %1574 = vmatpush.bf16.msra.mxu0 %v1154
        %1575 = vmatpush.bf16.msra.mxu0 %v1150
        %1576 = vmatpush.bf16.msra.mxu0 %v1146
        %1577 = vmatmul.bf16.gmra.mxu0 %v299
        %v1578 = vpop.f32.mrf.mxu0
        %v1579 = vadd.f32 %v1566, %v1578
        %v1580 = vpop.f32.mrf.mxu0
        %1581 = vdwg.mxu0
        %1582 = vmatpush.bf16.msra.mxu0 %v1206
        %1583 = vmatpush.bf16.msra.mxu0 %v1202
        %1584 = vmatpush.bf16.msra.mxu0 %v1198
        %1585 = vmatpush.bf16.msra.mxu0 %v1194
        %1586 = vmatpush.bf16.msra.mxu0 %v1190
        %1587 = vmatpush.bf16.msra.mxu0 %v1186
        %1588 = vmatpush.bf16.msra.mxu0 %v1182
        %1589 = vmatpush.bf16.msra.mxu0 %v1178
        %1590 = vmatmul.bf16.gmra.mxu0 %v300
        %v1591 = vpop.f32.mrf.mxu0
        %v1592 = vadd.f32 %v1579, %v1591
        %v1593 = vpop.f32.mrf.mxu0
        %1594 = vdwg.mxu0
        %1595 = vmatpush.bf16.msra.mxu0 %v1238
        %1596 = vmatpush.bf16.msra.mxu0 %v1234
        %1597 = vmatpush.bf16.msra.mxu0 %v1230
        %1598 = vmatpush.bf16.msra.mxu0 %v1226
        %1599 = vmatpush.bf16.msra.mxu0 %v1222
        %1600 = vmatpush.bf16.msra.mxu0 %v1218
        %1601 = vmatpush.bf16.msra.mxu0 %v1214
        %1602 = vmatpush.bf16.msra.mxu0 %v1210
        %1603 = vmatmul.bf16.gmra.mxu0 %v301
        %v1604 = vpop.f32.mrf.mxu0
        %v1605 = vadd.f32 %v1592, %v1604
        %v1606 = vpop.f32.mrf.mxu0
        %1607 = vdwg.mxu0
        %1608 = vmatpush.bf16.msra.mxu0 %v1270
        %1609 = vmatpush.bf16.msra.mxu0 %v1266
        %1610 = vmatpush.bf16.msra.mxu0 %v1262
        %1611 = vmatpush.bf16.msra.mxu0 %v1258
        %1612 = vmatpush.bf16.msra.mxu0 %v1254
        %1613 = vmatpush.bf16.msra.mxu0 %v1250
        %1614 = vmatpush.bf16.msra.mxu0 %v1246
        %1615 = vmatpush.bf16.msra.mxu0 %v1242
        %1616 = vmatmul.bf16.gmra.mxu0 %v302
        %v1617 = vpop.f32.mrf.mxu0
        %v1618 = vadd.f32 %v1605, %v1617
        %v1619 = vpop.f32.mrf.mxu0
        %1620 = vdwg.mxu0
        %1621 = vmatpush.bf16.msra.mxu0 %v1111
        %1622 = vmatpush.bf16.msra.mxu0 %v1107
        %1623 = vmatpush.bf16.msra.mxu0 %v1103
        %1624 = vmatpush.bf16.msra.mxu0 %v1099
        %1625 = vmatpush.bf16.msra.mxu0 %v1095
        %1626 = vmatpush.bf16.msra.mxu0 %v1091
        %1627 = vmatpush.bf16.msra.mxu0 %v1087
        %1628 = vmatpush.bf16.msra.mxu0 %v1083
        %1629 = vmatmul.bf16.gmra.mxu0 %v297
        %v1630 = vpop.f32.mrf.mxu0
        %v1631 = vadd.f32 %v499, %v1630
        %v1632 = vpop.f32.mrf.mxu0
        %1633 = vdwg.mxu0
        %1634 = vmatpush.bf16.msra.mxu0 %v1143
        %1635 = vmatpush.bf16.msra.mxu0 %v1139
        %1636 = vmatpush.bf16.msra.mxu0 %v1135
        %1637 = vmatpush.bf16.msra.mxu0 %v1131
        %1638 = vmatpush.bf16.msra.mxu0 %v1127
        %1639 = vmatpush.bf16.msra.mxu0 %v1123
        %1640 = vmatpush.bf16.msra.mxu0 %v1119
        %1641 = vmatpush.bf16.msra.mxu0 %v1115
        %1642 = vmatmul.bf16.gmra.mxu0 %v298
        %v1643 = vpop.f32.mrf.mxu0
        %v1644 = vadd.f32 %v1631, %v1643
        %v1645 = vpop.f32.mrf.mxu0
        %1646 = vdwg.mxu0
        %1647 = vmatpush.bf16.msra.mxu0 %v1175
        %1648 = vmatpush.bf16.msra.mxu0 %v1171
        %1649 = vmatpush.bf16.msra.mxu0 %v1167
        %1650 = vmatpush.bf16.msra.mxu0 %v1163
        %1651 = vmatpush.bf16.msra.mxu0 %v1159
        %1652 = vmatpush.bf16.msra.mxu0 %v1155
        %1653 = vmatpush.bf16.msra.mxu0 %v1151
        %1654 = vmatpush.bf16.msra.mxu0 %v1147
        %1655 = vmatmul.bf16.gmra.mxu0 %v299
        %v1656 = vpop.f32.mrf.mxu0
        %v1657 = vadd.f32 %v1644, %v1656
        %v1658 = vpop.f32.mrf.mxu0
        %1659 = vdwg.mxu0
        %1660 = vmatpush.bf16.msra.mxu0 %v1207
        %1661 = vmatpush.bf16.msra.mxu0 %v1203
        %1662 = vmatpush.bf16.msra.mxu0 %v1199
        %1663 = vmatpush.bf16.msra.mxu0 %v1195
        %1664 = vmatpush.bf16.msra.mxu0 %v1191
        %1665 = vmatpush.bf16.msra.mxu0 %v1187
        %1666 = vmatpush.bf16.msra.mxu0 %v1183
        %1667 = vmatpush.bf16.msra.mxu0 %v1179
        %1668 = vmatmul.bf16.gmra.mxu0 %v300
        %v1669 = vpop.f32.mrf.mxu0
        %v1670 = vadd.f32 %v1657, %v1669
        %v1671 = vpop.f32.mrf.mxu0
        %1672 = vdwg.mxu0
        %1673 = vmatpush.bf16.msra.mxu0 %v1239
        %1674 = vmatpush.bf16.msra.mxu0 %v1235
        %1675 = vmatpush.bf16.msra.mxu0 %v1231
        %1676 = vmatpush.bf16.msra.mxu0 %v1227
        %1677 = vmatpush.bf16.msra.mxu0 %v1223
        %1678 = vmatpush.bf16.msra.mxu0 %v1219
        %1679 = vmatpush.bf16.msra.mxu0 %v1215
        %1680 = vmatpush.bf16.msra.mxu0 %v1211
        %1681 = vmatmul.bf16.gmra.mxu0 %v301
        %v1682 = vpop.f32.mrf.mxu0
        %v1683 = vadd.f32 %v1670, %v1682
        %v1684 = vpop.f32.mrf.mxu0
        %1685 = vdwg.mxu0
        %1686 = vmatpush.bf16.msra.mxu0 %v1271
        %1687 = vmatpush.bf16.msra.mxu0 %v1267
        %1688 = vmatpush.bf16.msra.mxu0 %v1263
        %1689 = vmatpush.bf16.msra.mxu0 %v1259
        %1690 = vmatpush.bf16.msra.mxu0 %v1255
        %1691 = vmatpush.bf16.msra.mxu0 %v1251
        %1692 = vmatpush.bf16.msra.mxu0 %v1247
        %1693 = vmatpush.bf16.msra.mxu0 %v1243
        %1694 = vmatmul.bf16.gmra.mxu0 %v302
        %v1695 = vpop.f32.mrf.mxu0
        %v1696 = vadd.f32 %v1683, %v1695
        %v1697 = vpop.f32.mrf.mxu0
        %1698 = vdwg.mxu0
        %1699 = vmatpush.bf16.msra.mxu0 %v1112
        %1700 = vmatpush.bf16.msra.mxu0 %v1108
        %1701 = vmatpush.bf16.msra.mxu0 %v1104
        %1702 = vmatpush.bf16.msra.mxu0 %v1100
        %1703 = vmatpush.bf16.msra.mxu0 %v1096
        %1704 = vmatpush.bf16.msra.mxu0 %v1092
        %1705 = vmatpush.bf16.msra.mxu0 %v1088
        %1706 = vmatpush.bf16.msra.mxu0 %v1084
        %1707 = vmatmul.bf16.gmra.mxu0 %v297
        %v1708 = vpop.f32.mrf.mxu0
        %v1709 = vadd.f32 %v500, %v1708
        %v1710 = vpop.f32.mrf.mxu0
        %1711 = vdwg.mxu0
        %1712 = vmatpush.bf16.msra.mxu0 %v1144
        %1713 = vmatpush.bf16.msra.mxu0 %v1140
        %1714 = vmatpush.bf16.msra.mxu0 %v1136
        %1715 = vmatpush.bf16.msra.mxu0 %v1132
        %1716 = vmatpush.bf16.msra.mxu0 %v1128
        %1717 = vmatpush.bf16.msra.mxu0 %v1124
        %1718 = vmatpush.bf16.msra.mxu0 %v1120
        %1719 = vmatpush.bf16.msra.mxu0 %v1116
        %1720 = vmatmul.bf16.gmra.mxu0 %v298
        %v1721 = vpop.f32.mrf.mxu0
        %v1722 = vadd.f32 %v1709, %v1721
        %v1723 = vpop.f32.mrf.mxu0
        %1724 = vdwg.mxu0
        %1725 = vmatpush.bf16.msra.mxu0 %v1176
        %1726 = vmatpush.bf16.msra.mxu0 %v1172
        %1727 = vmatpush.bf16.msra.mxu0 %v1168
        %1728 = vmatpush.bf16.msra.mxu0 %v1164
        %1729 = vmatpush.bf16.msra.mxu0 %v1160
        %1730 = vmatpush.bf16.msra.mxu0 %v1156
        %1731 = vmatpush.bf16.msra.mxu0 %v1152
        %1732 = vmatpush.bf16.msra.mxu0 %v1148
        %1733 = vmatmul.bf16.gmra.mxu0 %v299
        %v1734 = vpop.f32.mrf.mxu0
        %v1735 = vadd.f32 %v1722, %v1734
        %v1736 = vpop.f32.mrf.mxu0
        %1737 = vdwg.mxu0
        %1738 = vmatpush.bf16.msra.mxu0 %v1208
        %1739 = vmatpush.bf16.msra.mxu0 %v1204
        %1740 = vmatpush.bf16.msra.mxu0 %v1200
        %1741 = vmatpush.bf16.msra.mxu0 %v1196
        %1742 = vmatpush.bf16.msra.mxu0 %v1192
        %1743 = vmatpush.bf16.msra.mxu0 %v1188
        %1744 = vmatpush.bf16.msra.mxu0 %v1184
        %1745 = vmatpush.bf16.msra.mxu0 %v1180
        %1746 = vmatmul.bf16.gmra.mxu0 %v300
        %v1747 = vpop.f32.mrf.mxu0
        %v1748 = vadd.f32 %v1735, %v1747
        %v1749 = vpop.f32.mrf.mxu0
        %1750 = vdwg.mxu0
        %1751 = vmatpush.bf16.msra.mxu0 %v1240
        %1752 = vmatpush.bf16.msra.mxu0 %v1236
        %1753 = vmatpush.bf16.msra.mxu0 %v1232
        %1754 = vmatpush.bf16.msra.mxu0 %v1228
        %1755 = vmatpush.bf16.msra.mxu0 %v1224
        %1756 = vmatpush.bf16.msra.mxu0 %v1220
        %1757 = vmatpush.bf16.msra.mxu0 %v1216
        %1758 = vmatpush.bf16.msra.mxu0 %v1212
        %1759 = vmatmul.bf16.gmra.mxu0 %v301
        %v1760 = vpop.f32.mrf.mxu0
        %v1761 = vadd.f32 %v1748, %v1760
        %v1762 = vpop.f32.mrf.mxu0
        %1763 = vdwg.mxu0
        %1764 = vmatpush.bf16.msra.mxu0 %v1272
        %1765 = vmatpush.bf16.msra.mxu0 %v1268
        %1766 = vmatpush.bf16.msra.mxu0 %v1264
        %1767 = vmatpush.bf16.msra.mxu0 %v1260
        %1768 = vmatpush.bf16.msra.mxu0 %v1256
        %1769 = vmatpush.bf16.msra.mxu0 %v1252
        %1770 = vmatpush.bf16.msra.mxu0 %v1248
        %1771 = vmatpush.bf16.msra.mxu0 %v1244
        %1772 = vmatmul.bf16.gmra.mxu0 %v302
        %v1773 = vpop.f32.mrf.mxu0
        %v1774 = vadd.f32 %v1761, %v1773
        %v1775 = vpop.f32.mrf.mxu0
        %1776 = vdwg.mxu0
        %v1777 = vmax.f32 %v1540, 0.0
        %v1778 = vmax.f32 %v1618, 0.0
        %v1779 = vmax.f32 %v1696, 0.0
        %v1780 = vmax.f32 %v1774, 0.0
        %v1781 = vpack.c.bf16 %v1777, %v1777
        %v1782 = vpack.c.bf16 %v1778, %v1778
        %v1783 = vpack.c.bf16 %v1779, %v1779
        %v1784 = vpack.c.bf16 %v1780, %v1780
        %v1785 = vld [vmem:[#allocation8] sm:$0xf]
        %v1786 = vld [vmem:[#allocation8 + $0x4] sm:$0xf]
        %v1787 = vld [vmem:[#allocation8 + $0x8] sm:$0xf]
        %v1788 = vld [vmem:[#allocation8 + $0xc] sm:$0xf]
        %v1789 = vld [vmem:[#allocation8 + $0x10] sm:$0xf]
        %v1790 = vld [vmem:[#allocation8 + $0x14] sm:$0xf]
        %v1791 = vld [vmem:[#allocation8 + $0x18] sm:$0xf]
        %v1792 = vld [vmem:[#allocation8 + $0x1c] sm:$0xf]
        %v1793 = vld [vmem:[#allocation8 + $0x20] sm:$0xf]
        %v1794 = vld [vmem:[#allocation8 + $0x24] sm:$0xf]
        %v1795 = vld [vmem:[#allocation8 + $0x28] sm:$0xf]
        %v1796 = vld [vmem:[#allocation8 + $0x2c] sm:$0xf]
        %v1797 = vld [vmem:[#allocation8 + $0x30] sm:$0xf]
        %v1798 = vld [vmem:[#allocation8 + $0x34] sm:$0xf]
        %v1799 = vld [vmem:[#allocation8 + $0x38] sm:$0xf]
        %v1800 = vld [vmem:[#allocation8 + $0x3c] sm:$0xf]
        %v1801 = vld [vmem:[#allocation8 + $0x40] sm:$0xf]
        %v1802 = vld [vmem:[#allocation8 + $0x44] sm:$0xf]
        %v1803 = vld [vmem:[#allocation8 + $0x48] sm:$0xf]
        %v1804 = vld [vmem:[#allocation8 + $0x4c] sm:$0xf]
        %v1805 = vld [vmem:[#allocation8 + $0x50] sm:$0xf]
        %v1806 = vld [vmem:[#allocation8 + $0x54] sm:$0xf]
        %v1807 = vld [vmem:[#allocation8 + $0x58] sm:$0xf]
        %v1808 = vld [vmem:[#allocation8 + $0x5c] sm:$0xf]
        %v1809 = vld [vmem:[#allocation8 + $0x60] sm:$0xf]
        %v1810 = vld [vmem:[#allocation8 + $0x64] sm:$0xf]
        %v1811 = vld [vmem:[#allocation8 + $0x68] sm:$0xf]
        %v1812 = vld [vmem:[#allocation8 + $0x6c] sm:$0xf]
        %v1813 = vld [vmem:[#allocation8 + $0x70] sm:$0xf]
        %v1814 = vld [vmem:[#allocation8 + $0x74] sm:$0xf]
        %v1815 = vld [vmem:[#allocation8 + $0x78] sm:$0xf]
        %v1816 = vld [vmem:[#allocation8 + $0x7c] sm:$0xf]
        %v1817 = vld [vmem:[#allocation8 + $0x80] sm:$0xf]
        %v1818 = vld [vmem:[#allocation8 + $0x84] sm:$0xf]
        %v1819 = vld [vmem:[#allocation8 + $0x88] sm:$0xf]
        %v1820 = vld [vmem:[#allocation8 + $0x8c] sm:$0xf]
        %v1821 = vld [vmem:[#allocation8 + $0x90] sm:$0xf]
        %v1822 = vld [vmem:[#allocation8 + $0x94] sm:$0xf]
        %v1823 = vld [vmem:[#allocation8 + $0x98] sm:$0xf]
        %v1824 = vld [vmem:[#allocation8 + $0x9c] sm:$0xf]
        %v1825 = vld [vmem:[#allocation8 + $0xa0] sm:$0xf]
        %v1826 = vld [vmem:[#allocation8 + $0xa4] sm:$0xf]
        %v1827 = vld [vmem:[#allocation8 + $0xa8] sm:$0xf]
        %v1828 = vld [vmem:[#allocation8 + $0xac] sm:$0xf]
        %v1829 = vld [vmem:[#allocation8 + $0xb0] sm:$0xf]
        %v1830 = vld [vmem:[#allocation8 + $0xb4] sm:$0xf]
        %v1831 = vld [vmem:[#allocation8 + $0xb8] sm:$0xf]
        %v1832 = vld [vmem:[#allocation8 + $0xbc] sm:$0xf]
        %v1833 = vld [vmem:[#allocation8 + $0xc0] sm:$0xf]
        %v1834 = vld [vmem:[#allocation8 + $0xc4] sm:$0xf]
        %v1835 = vld [vmem:[#allocation8 + $0xc8] sm:$0xf]
        %v1836 = vld [vmem:[#allocation8 + $0xcc] sm:$0xf]
        %v1837 = vld [vmem:[#allocation8 + $0xd0] sm:$0xf]
        %v1838 = vld [vmem:[#allocation8 + $0xd4] sm:$0xf]
        %v1839 = vld [vmem:[#allocation8 + $0xd8] sm:$0xf]
        %v1840 = vld [vmem:[#allocation8 + $0xdc] sm:$0xf]
        %v1841 = vld [vmem:[#allocation8 + $0xe0] sm:$0xf]
        %v1842 = vld [vmem:[#allocation8 + $0xe4] sm:$0xf]
        %v1843 = vld [vmem:[#allocation8 + $0xe8] sm:$0xf]
        %v1844 = vld [vmem:[#allocation8 + $0xec] sm:$0xf]
        %v1845 = vld [vmem:[#allocation8 + $0xf0] sm:$0xf]
        %v1846 = vld [vmem:[#allocation8 + $0xf4] sm:$0xf]
        %v1847 = vld [vmem:[#allocation8 + $0xf8] sm:$0xf]
        %v1848 = vld [vmem:[#allocation8 + $0xfc] sm:$0xf]
        %v1849 = vld [vmem:[%s4] sm:$0x1]
        %v1851 = vperm.slane %v1849, 0
        %v1917 = vunpack.c.l.b16 %v1785
        %v1918 = vunpack.c.l.b16 %v1786
        %v1919 = vunpack.c.l.b16 %v1787
        %v1920 = vunpack.c.l.b16 %v1788
        %v1921 = vunpack.c.l.b16 %v1789
        %v1922 = vunpack.c.l.b16 %v1790
        %v1923 = vunpack.c.l.b16 %v1791
        %v1924 = vunpack.c.l.b16 %v1792
        %v1925 = vunpack.c.l.b16 %v1793
        %v1926 = vunpack.c.l.b16 %v1794
        %v1927 = vunpack.c.l.b16 %v1795
        %v1928 = vunpack.c.l.b16 %v1796
        %v1929 = vunpack.c.l.b16 %v1797
        %v1930 = vunpack.c.l.b16 %v1798
        %v1931 = vunpack.c.l.b16 %v1799
        %v1932 = vunpack.c.l.b16 %v1800
        %v1933 = vunpack.c.l.b16 %v1801
        %v1934 = vunpack.c.l.b16 %v1802
        %v1935 = vunpack.c.l.b16 %v1803
        %v1936 = vunpack.c.l.b16 %v1804
        %v1937 = vunpack.c.l.b16 %v1805
        %v1938 = vunpack.c.l.b16 %v1806
        %v1939 = vunpack.c.l.b16 %v1807
        %v1940 = vunpack.c.l.b16 %v1808
        %v1941 = vunpack.c.l.b16 %v1809
        %v1942 = vunpack.c.l.b16 %v1810
        %v1943 = vunpack.c.l.b16 %v1811
        %v1944 = vunpack.c.l.b16 %v1812
        %v1945 = vunpack.c.l.b16 %v1813
        %v1946 = vunpack.c.l.b16 %v1814
        %v1947 = vunpack.c.l.b16 %v1815
        %v1948 = vunpack.c.l.b16 %v1816
        %v1949 = vunpack.c.l.b16 %v1817
        %v1950 = vunpack.c.l.b16 %v1818
        %v1951 = vunpack.c.l.b16 %v1819
        %v1952 = vunpack.c.l.b16 %v1820
        %v1953 = vunpack.c.l.b16 %v1821
        %v1954 = vunpack.c.l.b16 %v1822
        %v1955 = vunpack.c.l.b16 %v1823
        %v1956 = vunpack.c.l.b16 %v1824
        %v1957 = vunpack.c.l.b16 %v1825
        %v1958 = vunpack.c.l.b16 %v1826
        %v1959 = vunpack.c.l.b16 %v1827
        %v1960 = vunpack.c.l.b16 %v1828
        %v1961 = vunpack.c.l.b16 %v1829
        %v1962 = vunpack.c.l.b16 %v1830
        %v1963 = vunpack.c.l.b16 %v1831
        %v1964 = vunpack.c.l.b16 %v1832
        %v1965 = vunpack.c.l.b16 %v1833
        %v1966 = vunpack.c.l.b16 %v1834
        %v1967 = vunpack.c.l.b16 %v1835
        %v1968 = vunpack.c.l.b16 %v1836
        %v1969 = vunpack.c.l.b16 %v1837
        %v1970 = vunpack.c.l.b16 %v1838
        %v1971 = vunpack.c.l.b16 %v1839
        %v1972 = vunpack.c.l.b16 %v1840
        %v1973 = vunpack.c.l.b16 %v1841
        %v1974 = vunpack.c.l.b16 %v1842
        %v1975 = vunpack.c.l.b16 %v1843
        %v1976 = vunpack.c.l.b16 %v1844
        %v1977 = vunpack.c.l.b16 %v1845
        %v1978 = vunpack.c.l.b16 %v1846
        %v1979 = vunpack.c.l.b16 %v1847
        %v1980 = vunpack.c.l.b16 %v1848
        %v1981 = vpack.c.b16 %v1918, %v1917
        %v1982 = vpack.c.b16 %v1920, %v1919
        %v1983 = vpack.c.b16 %v1922, %v1921
        %v1984 = vpack.c.b16 %v1924, %v1923
        %v1985 = vpack.c.b16 %v1926, %v1925
        %v1986 = vpack.c.b16 %v1928, %v1927
        %v1987 = vpack.c.b16 %v1930, %v1929
        %v1988 = vpack.c.b16 %v1932, %v1931
        %v1989 = vpack.c.b16 %v1934, %v1933
        %v1990 = vpack.c.b16 %v1936, %v1935
        %v1991 = vpack.c.b16 %v1938, %v1937
        %v1992 = vpack.c.b16 %v1940, %v1939
        %v1993 = vpack.c.b16 %v1942, %v1941
        %v1994 = vpack.c.b16 %v1944, %v1943
        %v1995 = vpack.c.b16 %v1946, %v1945
        %v1996 = vpack.c.b16 %v1948, %v1947
        %v1997 = vpack.c.b16 %v1950, %v1949
        %v1998 = vpack.c.b16 %v1952, %v1951
        %v1999 = vpack.c.b16 %v1954, %v1953
        %v2000 = vpack.c.b16 %v1956, %v1955
        %v2001 = vpack.c.b16 %v1958, %v1957
        %v2002 = vpack.c.b16 %v1960, %v1959
        %v2003 = vpack.c.b16 %v1962, %v1961
        %v2004 = vpack.c.b16 %v1964, %v1963
        %v2005 = vpack.c.b16 %v1966, %v1965
        %v2006 = vpack.c.b16 %v1968, %v1967
        %v2007 = vpack.c.b16 %v1970, %v1969
        %v2008 = vpack.c.b16 %v1972, %v1971
        %v2009 = vpack.c.b16 %v1974, %v1973
        %v2010 = vpack.c.b16 %v1976, %v1975
        %v2011 = vpack.c.b16 %v1978, %v1977
        %v2012 = vpack.c.b16 %v1980, %v1979
        %2045 = vmatpush.bf16.msra.mxu0 %v1988
        %2046 = vmatpush.bf16.msra.mxu0 %v1987
        %2047 = vmatpush.bf16.msra.mxu0 %v1986
        %2048 = vmatpush.bf16.msra.mxu0 %v1985
        %2049 = vmatpush.bf16.msra.mxu0 %v1984
        %2050 = vmatpush.bf16.msra.mxu0 %v1983
        %2051 = vmatpush.bf16.msra.mxu0 %v1982
        %2052 = vmatpush.bf16.msra.mxu0 %v1981
        %2053 = vmatmul.bf16.gmra.mxu0 %v1781
        %v2054 = vpop.f32.mrf.mxu0
        %v2055 = vadd.f32 %v1851, %v2054
        %v2056 = vpop.f32.mrf.mxu0
        %2057 = vdwg.mxu0
        %2058 = vmatpush.bf16.msra.mxu0 %v1996
        %2059 = vmatpush.bf16.msra.mxu0 %v1995
        %2060 = vmatpush.bf16.msra.mxu0 %v1994
        %2061 = vmatpush.bf16.msra.mxu0 %v1993
        %2062 = vmatpush.bf16.msra.mxu0 %v1992
        %2063 = vmatpush.bf16.msra.mxu0 %v1991
        %2064 = vmatpush.bf16.msra.mxu0 %v1990
        %2065 = vmatpush.bf16.msra.mxu0 %v1989
        %2066 = vmatmul.bf16.gmra.mxu0 %v1782
        %v2067 = vpop.f32.mrf.mxu0
        %v2068 = vadd.f32 %v2055, %v2067
        %v2069 = vpop.f32.mrf.mxu0
        %2070 = vdwg.mxu0
        %2071 = vmatpush.bf16.msra.mxu0 %v2004
        %2072 = vmatpush.bf16.msra.mxu0 %v2003
        %2073 = vmatpush.bf16.msra.mxu0 %v2002
        %2074 = vmatpush.bf16.msra.mxu0 %v2001
        %2075 = vmatpush.bf16.msra.mxu0 %v2000
        %2076 = vmatpush.bf16.msra.mxu0 %v1999
        %2077 = vmatpush.bf16.msra.mxu0 %v1998
        %2078 = vmatpush.bf16.msra.mxu0 %v1997
        %2079 = vmatmul.bf16.gmra.mxu0 %v1783
        %v2080 = vpop.f32.mrf.mxu0
        %v2081 = vadd.f32 %v2068, %v2080
        %v2082 = vpop.f32.mrf.mxu0
        %2083 = vdwg.mxu0
        %2084 = vmatpush.bf16.msra.mxu0 %v2012
        %2085 = vmatpush.bf16.msra.mxu0 %v2011
        %2086 = vmatpush.bf16.msra.mxu0 %v2010
        %2087 = vmatpush.bf16.msra.mxu0 %v2009
        %2088 = vmatpush.bf16.msra.mxu0 %v2008
        %2089 = vmatpush.bf16.msra.mxu0 %v2007
        %2090 = vmatpush.bf16.msra.mxu0 %v2006
        %2091 = vmatpush.bf16.msra.mxu0 %v2005
        %2092 = vmatmul.bf16.gmra.mxu0 %v1784
        %v2093 = vpop.f32.mrf.mxu0
        %v2094 = vadd.f32 %v2081, %v2093
        %v2095 = vpop.f32.mrf.mxu0
        %2096 = vdwg.mxu0
        %vm2097 = vcmask 154624
        %2098 = vst.msk [vmem:[%s290] sm:$0xff] %vm2097, %v2094
        %s2099 = sand.u32 %s142, 1
        %s2100 = scalar_lea.sflag [#allocation4], %s2099
        %s2101 = sand.u32 %s142, 1
        %s2102 = smul.addr %s2101, 8
        %s2103 = scalar_lea.vmem [#allocation10], %s2102
        // Predicated region
        $region57: #{tpu_custom_call.1} parent=39 // pred_check
          %p2104 = pneg %p152
        $region58: #{tpu_custom_call.1} parent=39 // pred_check_branch
          %2106 = sbr.rel (%p2104) target = $region60
        $region59: #{tpu_custom_call.1} parent=39 // pred_region
          %2108 = vsyncadd %s2100, 0
          %s2109 = smul.addr %s24, 8
          %s2110 = scalar_lea.hbm %s5, %s2109
          %s2112 = sshll.u32 %s2103, 4
          %s2113 = int_to_ptr.vmem [resolvable:$true] %s2112
          %s2114 = sshll.u32 %s2110, 4
          %s2115 = int_to_ptr.hbm [resolvable:$true] %s2114
          %2117 = dma.vmem_to_hbm [thread:$0]  %s2113, 128, %s2115, %s2100
        $region60: #{tpu_custom_call.1} parent=39 // pred_fallthru
          _
      $region40: #{tpu_custom_call.1} parent=5 // pred_fallthru
        _
      %p2118 = scmp.le.s32.totalorder 2, %s19
      // Predicated region
      $region61: #{tpu_custom_call.1} parent=5 // pred_check
        %p2119 = pneg %p2118
      $region62: #{tpu_custom_call.1} parent=5 // pred_check_branch
        %2121 = sbr.rel (%p2119) target = $region64
      $region63: #{tpu_custom_call.1} parent=5 // pred_region
        %s2122 = ssub.s32 %s19, 2
        // Predicated region
        $region65: #{tpu_custom_call.1} parent=63 // pred_check
          %p2123 = pneg %p158
        $region66: #{tpu_custom_call.1} parent=63 // pred_check_branch
          %2125 = sbr.rel (%p2123) target = $region68
        $region67: #{tpu_custom_call.1} parent=63 // pred_region
          %s2126 = sand.u32 %s143, 1
          %s2127 = scalar_lea.sflag [#allocation4], %s2126
          %s2128 = sand.u32 %s143, 1
          %s2129 = smul.addr %s2128, 8
          %s2130 = scalar_lea.vmem [#allocation10], %s2129
          %2132 = dma.done %s2127, 128
        $region68: #{tpu_custom_call.1} parent=63 // pred_fallthru
          _
      $region64: #{tpu_custom_call.1} parent=5 // pred_fallthru
        _
    $region6: #{tpu_custom_call.1} parent=1 // loop_footer
      %s23 = sadd.s32 1, %s19
    $region7: #{tpu_custom_call.1} parent=1 // loop_footer_branch
      %18 = sbr.rel target = $region3
    $region8: #{tpu_custom_call.1} parent=1 // loop_exit
      _
    %2133 = vsyncpa [#allocation3], 1
    %s2134 = scalar_lea.sflag [#allocation3], 1
    %2135 = vsyncpa %s2134, 1
    %2136 = vsyncpa [#allocation6], 1
    %2137 = vsyncpa [#allocation9], 1
    %2138 = vsyncpa [#allocation4], 1
    %s2139 = scalar_lea.sflag [#allocation4], 1
    %2140 = vsyncpa %s2139, 1

</llo_original>
